<compile_context>
chip_gen: v7x
topology: tpu7x:2x2x1
jax: 0.10.0
libtpu: 0.0.40
codegen_flags: <defaults>
</compile_context>

<pallas_src>
import jax
import jax.numpy as jnp
from jax import lax
from jax.experimental import pallas as pl
from jax.experimental.pallas import tpu as pltpu

_KS = 7            # spatial conv kernel size
_PAD = (_KS - 1) // 2


def _flat_to_2d(v, H, W):
    # (1, H*W) -> (H, W) via lane slices + one sublane concat (tiny data;
    # avoids relying on general in-kernel reshapes).
    return jnp.concatenate([v[:, h * W:(h + 1) * W] for h in range(H)], axis=0)


def _2d_to_flat(m, H, W):
    # (H, W) -> (1, H*W): inverse of _flat_to_2d (row-major order).
    return jnp.concatenate([m[h:h + 1, :] for h in range(H)], axis=1)


def _make_cbam_kernel(H, W, bt):
    HW = H * W

    def kernel(x_ref, w1t_ref, b1_ref, w2t_ref, b2_ref, bmat_ref, bsp_ref,
               out_ref):
        # ------------------------------------------------------------------
        # ChannelGate: spatial avg/max pool -> shared MLP -> sigmoid scale.
        # ------------------------------------------------------------------
        x = x_ref[...].astype(jnp.float32)             # (bt, C, HW), cast once

        avg = jnp.mean(x, axis=2)                      # (bt, C)  lane reduce
        mx = jnp.max(x, axis=2)                        # (bt, C)
        pooled = jnp.concatenate([avg, mx], axis=0)    # (2*bt, C) both pools

        # One batched MLP pass for both pool types (N = 2*bt rows).
        h = jnp.dot(pooled, w1t_ref[...],
                    preferred_element_type=jnp.float32) + b1_ref[...]
        h = h * jax.nn.sigmoid(h)                      # SiLU
        o = jnp.dot(h, w2t_ref[...],
                    preferred_element_type=jnp.float32) + b2_ref[...]
        att = o[:bt, :] + o[bt:, :]                    # (bt, C), sum over pools

        c_scale = jax.nn.sigmoid(att)[:, :, None]      # (bt, C, 1)
        y = x * c_scale                                # (bt, C, HW) lane dense

        # ------------------------------------------------------------------
        # SpatialGate per sample: ChannelPool (sublane reduces), 7x7 conv as
        # 14 banded MXU matmuls, GroupNorm(1), sigmoid, lane-dense scale.
        # ------------------------------------------------------------------
        for b in range(bt):                            # static, unrolled
            yb = y[b]                                  # (C, HW)
            cp_max = jnp.max(yb, axis=0, keepdims=True)    # (1, HW)
            cp_mean = jnp.mean(yb, axis=0, keepdims=True)  # (1, HW)

            pmax = jnp.pad(_flat_to_2d(cp_max, H, W),
                           ((_PAD, _PAD), (_PAD, _PAD)))   # (H+6, W+6)
            pmean = jnp.pad(_flat_to_2d(cp_mean, H, W),
                            ((_PAD, _PAD), (_PAD, _PAD)))

            acc = jnp.zeros((H, W), jnp.float32)
            for kh in range(_KS):                      # 14 tiny MXU matmuls
                acc = acc + jnp.dot(pmax[kh:kh + H, :], bmat_ref[0, kh],
                                    preferred_element_type=jnp.float32)
                acc = acc + jnp.dot(pmean[kh:kh + H, :], bmat_ref[1, kh],
                                    preferred_element_type=jnp.float32)
            acc = acc + bsp_ref[0]                     # conv bias (SMEM scalar)

            # GroupNorm(num_groups=1) over the (1, H, W) map, identity affine.
            mean = jnp.mean(acc)
            var = jnp.mean((acc - mean) ** 2)
            sp = jax.nn.sigmoid((acc - mean) * lax.rsqrt(var + 1e-5))

            s_flat = _2d_to_flat(sp, H, W)             # (1, HW) lane dense
            out_ref[b] = (yb * s_flat).astype(out_ref.dtype)   # full-width vst

    return kernel


def _pick_batch_tile(B, C, HW, itemsize):
    """Batch items per grid step: big blocks to amortize per-step overhead on
    single-TC chips (v5e/v6e), but keep >= 2 grid steps when B allows so both
    v7x TensorCores get work on the 'parallel' batch axis."""
    per_item = max(C * HW * itemsize, 1)
    bt = max(1, min(B, (1 << 20) // per_item))         # target ~1 MiB blocks
    while B % bt:
        bt -= 1
    if B >= 2 and B // bt < 2:
        bt = max(1, B // 2)
        while B % bt:
            bt -= 1
    return bt


def cbam_forward(x, params, *, batch_tile=None):
    """Fused CBAM forward pass.

    params (PyTorch layouts):
      w1: (Ch, C)  Linear(C->Ch).weight     b1: (Ch,)
      w2: (C, Ch)  Linear(Ch->C).weight     b2: (C,)
      wconv: (1, 2, 7, 7) Conv2d(2,1,7).weight   bconv: (1,)
    """
    w1, b1, w2, b2, wconv, bconv = params
    B, C, H, W = x.shape
    HW = H * W
    Ch = w1.shape[0]
    Hp, Wp = H + 2 * _PAD, W + 2 * _PAD

    bt = batch_tile if batch_tile is not None else _pick_batch_tile(
        B, C, HW, x.dtype.itemsize)
    assert B % bt == 0, (B, bt)

    # MLP weights oriented for (samples x features) row-major matmuls.
    w1t = w1.T.astype(jnp.float32)                     # (C, Ch)
    w2t = w2.T.astype(jnp.float32)                     # (Ch, C)
    b1r = b1.reshape(1, Ch).astype(jnp.float32)
    b2r = b2.reshape(1, C).astype(jnp.float32)

    # Banded matrices so the 7x7 conv becomes matmuls inside the kernel:
    #   conv = bias + sum_{c, kh} padded[c, kh:kh+H, :] @ bmat[c, kh]
    # with bmat[c, kh, w + kw, w] = wconv[0, c, kh, kw]  (zero elsewhere).
    wt = wconv.reshape(2, _KS, _KS).astype(jnp.float32)
    shift = jnp.stack([jnp.eye(Wp, W, k=-kw, dtype=jnp.float32)
                       for kw in range(_KS)], axis=0)          # (7, Wp, W)
    bmat = jnp.einsum('chk,kjw->chjw', wt, shift)              # (2, 7, Wp, W)
    bconv_s = bconv.reshape(1).astype(jnp.float32)

    x2 = x.reshape(B, C, HW)       # contiguous reshape: free outside kernel

    out = pl.pallas_call(
        _make_cbam_kernel(H, W, bt),
        out_shape=jax.ShapeDtypeStruct((B, C, HW), x.dtype),
        grid=(B // bt,),
        in_specs=[
            pl.BlockSpec((bt, C, HW), lambda i: (i, 0, 0)),
            pl.BlockSpec((C, Ch), lambda i: (0, 0)),
            pl.BlockSpec((1, Ch), lambda i: (0, 0)),
            pl.BlockSpec((Ch, C), lambda i: (0, 0)),
            pl.BlockSpec((1, C), lambda i: (0, 0)),
            pl.BlockSpec((2, _KS, Wp, W), lambda i: (0, 0, 0, 0)),
            pl.BlockSpec(memory_space=pltpu.MemorySpace.SMEM),
        ],
        out_specs=pl.BlockSpec((bt, C, HW), lambda i: (i, 0, 0)),
        compiler_params=pltpu.CompilerParams(
            dimension_semantics=("parallel",),
            vmem_limit_bytes=32 * 1024 * 1024,
        ),
    )(x2, w1t, b1r, w2t, b2r, bmat, bconv_s)

    return out.reshape(B, C, H, W)


# ----------------------------------------------------------------------------
# Pure-JAX reference (same math) for a correctness check.
# ----------------------------------------------------------------------------
def cbam_ref(x, params):
    w1, b1, w2, b2, wconv, bconv = params
    B, C, H, W = x.shape
    flat = x.reshape(B, C, H * W)
    avg = flat.mean(-1)                                 # (B, C)
    mx = flat.max(-1)

    def mlp(p):
        h = p @ w1.T + b1
        h = h * jax.nn.sigmoid(h)                       # SiLU
        return h @ w2.T + b2

    att = mlp(avg) + mlp(mx)
    y = x * jax.nn.sigmoid(att)[:, :, None, None]

    cp = jnp.stack([y.max(1), y.mean(1)], axis=1)       # (B, 2, H, W)
    conv = lax.conv_general_dilated(
        cp, wconv, window_strides=(1, 1), padding=[(3, 3), (3, 3)],
        dimension_numbers=("NCHW", "OIHW", "NCHW")) + bconv[0]
    mean = conv.mean(axis=(1, 2, 3), keepdims=True)
    var = ((conv - mean) ** 2).mean(axis=(1, 2, 3), keepdims=True)
    normed = (conv - mean) / jnp.sqrt(var + 1e-5)
    return y * jax.nn.sigmoid(normed)


if __name__ == "__main__":
    B, C, H, W = 2, 32, 16, 16             # gate_channels=32, reduction_ratio=16
    Ch = max(C // 16, 1)                   # hidden MLP width = 2

    key = jax.random.PRNGKey(0)
    k = jax.random.split(key, 7)
    x = jax.random.normal(k[0], (B, C, H, W), jnp.float32)

    # ChannelGate MLP params (PyTorch Linear layouts).
    w1 = 0.3 * jax.random.normal(k[1], (Ch, C), jnp.float32)   # Linear(C -> Ch)
    b1 = 0.1 * jax.random.normal(k[2], (Ch,), jnp.float32)
    w2 = 0.3 * jax.random.normal(k[3], (C, Ch), jnp.float32)   # Linear(Ch -> C)
    b2 = 0.1 * jax.random.normal(k[4], (C,), jnp.float32)

    # SpatialGate 7x7 conv (2 -> 1 channels): [max-channel, mean-channel].
    wconv = 0.1 * jax.random.normal(k[5], (1, 2, 7, 7), jnp.float32)
    bconv = 0.1 * jax.random.normal(k[6], (1,), jnp.float32)

    params = (w1, b1, w2, b2, wconv, bconv)

    out = jax.block_until_ready(cbam_forward(x, params))
    ref = jax.block_until_ready(cbam_ref(x, params))

    assert out.shape == x.shape and out.dtype == x.dtype
    assert jnp.allclose(out, ref, atol=1e-4, rtol=1e-4), "mismatch vs reference"
    print("KERNEL_OK")
</pallas_src>

<mosaic_0001>
module attributes {stable_mosaic.version = 11 : i64} {
  func.func @kernel(%arg0: i32, %arg1: memref<1x32x256xf32, #tpu.memory_space<vmem>>, %arg2: memref<32x2xf32, #tpu.memory_space<vmem>>, %arg3: memref<1x2xf32, #tpu.memory_space<vmem>>, %arg4: memref<2x32xf32, #tpu.memory_space<vmem>>, %arg5: memref<1x32xf32, #tpu.memory_space<vmem>>, %arg6: memref<2x7x22x16xf32, #tpu.memory_space<vmem>>, %arg7: memref<1xf32, #tpu.memory_space<smem>>, %arg8: memref<1x32x256xf32, #tpu.memory_space<vmem>>) attributes {dimension_semantics = [#tpu.dimension_semantics<parallel>], iteration_bounds = array<i64: 2>, scalar_prefetch = 0 : i64, scratch_operands = 0 : i64, tpu.core_type = #tpu.core_type<tc>, window_params = [{transform_indices = @transform_0, window_bounds = array<i64: 1, 32, 256>}, {pipeline_mode = #tpu.pipeline_mode<synchronous>, transform_indices = @transform_1, window_bounds = array<i64: 32, 2>}, {pipeline_mode = #tpu.pipeline_mode<synchronous>, transform_indices = @transform_2, window_bounds = array<i64: 1, 2>}, {pipeline_mode = #tpu.pipeline_mode<synchronous>, transform_indices = @transform_3, window_bounds = array<i64: 2, 32>}, {pipeline_mode = #tpu.pipeline_mode<synchronous>, transform_indices = @transform_4, window_bounds = array<i64: 1, 32>}, {pipeline_mode = #tpu.pipeline_mode<synchronous>, transform_indices = @transform_5, window_bounds = array<i64: 2, 7, 22, 16>}, {transform_indices = @transform_6, window_bounds = array<i64: 1>}, {transform_indices = @transform_7, window_bounds = array<i64: 1, 32, 256>}]} {
    %c0 = arith.constant 0 : index
    %c0_0 = arith.constant 0 : index
    %c0_1 = arith.constant 0 : index
    %0 = vector.load %arg1[%c0, %c0_0, %c0_1] : memref<1x32x256xf32, #tpu.memory_space<vmem>>, vector<1x32x256xf32>
    %cst = arith.constant dense<0.000000e+00> : vector<1x32xf32>
    %1 = vector.multi_reduction <add>, %0, %cst [2] : vector<1x32x256xf32> to vector<1x32xf32>
    %cst_2 = arith.constant 2.560000e+02 : f32
    %2 = vector.broadcast %cst_2 : f32 to vector<1x32xf32>
    %3 = arith.divf %1, %2 : vector<1x32xf32>
    %cst_3 = arith.constant dense<0xFF800000> : vector<1x32xf32>
    %4 = vector.multi_reduction <maximumf>, %0, %cst_3 [2] : vector<1x32x256xf32> to vector<1x32xf32>
    %5 = tpu.concatenate %3, %4 in 0 : vector<1x32xf32>, vector<1x32xf32> -> vector<2x32xf32>
    %c0_4 = arith.constant 0 : index
    %c0_5 = arith.constant 0 : index
    %6 = vector.load %arg2[%c0_4, %c0_5] : memref<32x2xf32, #tpu.memory_space<vmem>>, vector<32x2xf32>
    %cst_6 = arith.constant dense<0.000000e+00> : vector<2x2xf32>
    %7 = tpu.matmul %5, %6, %cst_6 {dimension_numbers = #tpu.dot_dimension_numbers<[1], [0], [0], [1], [0, 0, 1, 1], [], []>} : vector<2x32xf32>, vector<32x2xf32>, vector<2x2xf32> -> vector<2x2xf32>
    %c0_7 = arith.constant 0 : index
    %c0_8 = arith.constant 0 : index
    %8 = vector.load %arg3[%c0_7, %c0_8] : memref<1x2xf32, #tpu.memory_space<vmem>>, vector<1x2xf32>
    %9 = vector.broadcast %8 : vector<1x2xf32> to vector<2x2xf32>
    %10 = arith.addf %7, %9 : vector<2x2xf32>
    %11 = arith.negf %10 : vector<2x2xf32>
    %12 = math.exp %11 : vector<2x2xf32>
    %cst_9 = arith.constant 1.000000e+00 : f32
    %13 = vector.broadcast %cst_9 : f32 to vector<2x2xf32>
    %14 = arith.addf %13, %12 : vector<2x2xf32>
    %15 = arith.divf %13, %14 : vector<2x2xf32>
    %16 = arith.mulf %10, %15 : vector<2x2xf32>
    %c0_10 = arith.constant 0 : index
    %c0_11 = arith.constant 0 : index
    %17 = vector.load %arg4[%c0_10, %c0_11] : memref<2x32xf32, #tpu.memory_space<vmem>>, vector<2x32xf32>
    %cst_12 = arith.constant dense<0.000000e+00> : vector<2x32xf32>
    %18 = tpu.matmul %16, %17, %cst_12 {dimension_numbers = #tpu.dot_dimension_numbers<[1], [0], [0], [1], [0, 0, 1, 1], [], []>} : vector<2x2xf32>, vector<2x32xf32>, vector<2x32xf32> -> vector<2x32xf32>
    %c0_13 = arith.constant 0 : index
    %c0_14 = arith.constant 0 : index
    %19 = vector.load %arg5[%c0_13, %c0_14] : memref<1x32xf32, #tpu.memory_space<vmem>>, vector<1x32xf32>
    %20 = vector.broadcast %19 : vector<1x32xf32> to vector<2x32xf32>
    %21 = arith.addf %18, %20 : vector<2x32xf32>
    %22 = vector.extract_strided_slice %21 {offsets = [0, 0], sizes = [1, 32], strides = [1, 1]} : vector<2x32xf32> to vector<1x32xf32>
    %23 = vector.extract_strided_slice %21 {offsets = [1, 0], sizes = [1, 32], strides = [1, 1]} : vector<2x32xf32> to vector<1x32xf32>
    %24 = arith.addf %22, %23 : vector<1x32xf32>
    %25 = arith.negf %24 : vector<1x32xf32>
    %26 = math.exp %25 : vector<1x32xf32>
    %cst_15 = arith.constant 1.000000e+00 : f32
    %27 = vector.broadcast %cst_15 : f32 to vector<1x32xf32>
    %28 = arith.addf %27, %26 : vector<1x32xf32>
    %29 = arith.divf %27, %28 : vector<1x32xf32>
    %30 = vector.shape_cast %29 : vector<1x32xf32> to vector<1x32x1xf32>
    %31 = vector.broadcast %30 : vector<1x32x1xf32> to vector<1x32x256xf32>
    %32 = arith.mulf %0, %31 : vector<1x32x256xf32>
    %33 = vector.shape_cast %32 : vector<1x32x256xf32> to vector<32x256xf32>
    %cst_16 = arith.constant dense<0xFF800000> : vector<256xf32>
    %34 = vector.multi_reduction <maximumf>, %33, %cst_16 [0] : vector<32x256xf32> to vector<256xf32>
    %35 = vector.shape_cast %34 : vector<256xf32> to vector<1x256xf32>
    %cst_17 = arith.constant dense<0.000000e+00> : vector<256xf32>
    %36 = vector.multi_reduction <add>, %33, %cst_17 [0] : vector<32x256xf32> to vector<256xf32>
    %37 = vector.shape_cast %36 : vector<256xf32> to vector<1x256xf32>
    %cst_18 = arith.constant 3.200000e+01 : f32
    %38 = vector.broadcast %cst_18 : f32 to vector<1x256xf32>
    %39 = arith.divf %37, %38 : vector<1x256xf32>
    %40 = vector.extract_strided_slice %35 {offsets = [0, 0], sizes = [1, 16], strides = [1, 1]} : vector<1x256xf32> to vector<1x16xf32>
    %41 = vector.extract_strided_slice %35 {offsets = [0, 16], sizes = [1, 16], strides = [1, 1]} : vector<1x256xf32> to vector<1x16xf32>
    %42 = vector.extract_strided_slice %35 {offsets = [0, 32], sizes = [1, 16], strides = [1, 1]} : vector<1x256xf32> to vector<1x16xf32>
    %43 = vector.extract_strided_slice %35 {offsets = [0, 48], sizes = [1, 16], strides = [1, 1]} : vector<1x256xf32> to vector<1x16xf32>
    %44 = vector.extract_strided_slice %35 {offsets = [0, 64], sizes = [1, 16], strides = [1, 1]} : vector<1x256xf32> to vector<1x16xf32>
    %45 = vector.extract_strided_slice %35 {offsets = [0, 80], sizes = [1, 16], strides = [1, 1]} : vector<1x256xf32> to vector<1x16xf32>
    %46 = vector.extract_strided_slice %35 {offsets = [0, 96], sizes = [1, 16], strides = [1, 1]} : vector<1x256xf32> to vector<1x16xf32>
    %47 = vector.extract_strided_slice %35 {offsets = [0, 112], sizes = [1, 16], strides = [1, 1]} : vector<1x256xf32> to vector<1x16xf32>
    %48 = vector.extract_strided_slice %35 {offsets = [0, 128], sizes = [1, 16], strides = [1, 1]} : vector<1x256xf32> to vector<1x16xf32>
    %49 = vector.extract_strided_slice %35 {offsets = [0, 144], sizes = [1, 16], strides = [1, 1]} : vector<1x256xf32> to vector<1x16xf32>
    %50 = vector.extract_strided_slice %35 {offsets = [0, 160], sizes = [1, 16], strides = [1, 1]} : vector<1x256xf32> to vector<1x16xf32>
    %51 = vector.extract_strided_slice %35 {offsets = [0, 176], sizes = [1, 16], strides = [1, 1]} : vector<1x256xf32> to vector<1x16xf32>
    %52 = vector.extract_strided_slice %35 {offsets = [0, 192], sizes = [1, 16], strides = [1, 1]} : vector<1x256xf32> to vector<1x16xf32>
    %53 = vector.extract_strided_slice %35 {offsets = [0, 208], sizes = [1, 16], strides = [1, 1]} : vector<1x256xf32> to vector<1x16xf32>
    %54 = vector.extract_strided_slice %35 {offsets = [0, 224], sizes = [1, 16], strides = [1, 1]} : vector<1x256xf32> to vector<1x16xf32>
    %55 = vector.extract_strided_slice %35 {offsets = [0, 240], sizes = [1, 16], strides = [1, 1]} : vector<1x256xf32> to vector<1x16xf32>
    %56 = tpu.concatenate %40, %41, %42, %43, %44, %45, %46, %47, %48, %49, %50, %51, %52, %53, %54, %55 in 0 : vector<1x16xf32>, vector<1x16xf32>, vector<1x16xf32>, vector<1x16xf32>, vector<1x16xf32>, vector<1x16xf32>, vector<1x16xf32>, vector<1x16xf32>, vector<1x16xf32>, vector<1x16xf32>, vector<1x16xf32>, vector<1x16xf32>, vector<1x16xf32>, vector<1x16xf32>, vector<1x16xf32>, vector<1x16xf32> -> vector<16x16xf32>
    %c0_i32 = arith.constant 0 : i32
    %57 = arith.sitofp %c0_i32 : i32 to f32
    %58 = vector.broadcast %57 : f32 to vector<3x16xf32>
    %59 = tpu.concatenate %58, %56 in 0 : vector<3x16xf32>, vector<16x16xf32> -> vector<19x16xf32>
    %60 = vector.broadcast %57 : f32 to vector<3x16xf32>
    %61 = tpu.concatenate %59, %60 in 0 : vector<19x16xf32>, vector<3x16xf32> -> vector<22x16xf32>
    %62 = vector.broadcast %57 : f32 to vector<22x3xf32>
    %63 = tpu.concatenate %62, %61 in 1 : vector<22x3xf32>, vector<22x16xf32> -> vector<22x19xf32>
    %64 = vector.broadcast %57 : f32 to vector<22x3xf32>
    %65 = tpu.concatenate %63, %64 in 1 : vector<22x19xf32>, vector<22x3xf32> -> vector<22x22xf32>
    %66 = vector.extract_strided_slice %39 {offsets = [0, 0], sizes = [1, 16], strides = [1, 1]} : vector<1x256xf32> to vector<1x16xf32>
    %67 = vector.extract_strided_slice %39 {offsets = [0, 16], sizes = [1, 16], strides = [1, 1]} : vector<1x256xf32> to vector<1x16xf32>
    %68 = vector.extract_strided_slice %39 {offsets = [0, 32], sizes = [1, 16], strides = [1, 1]} : vector<1x256xf32> to vector<1x16xf32>
    %69 = vector.extract_strided_slice %39 {offsets = [0, 48], sizes = [1, 16], strides = [1, 1]} : vector<1x256xf32> to vector<1x16xf32>
    %70 = vector.extract_strided_slice %39 {offsets = [0, 64], sizes = [1, 16], strides = [1, 1]} : vector<1x256xf32> to vector<1x16xf32>
    %71 = vector.extract_strided_slice %39 {offsets = [0, 80], sizes = [1, 16], strides = [1, 1]} : vector<1x256xf32> to vector<1x16xf32>
    %72 = vector.extract_strided_slice %39 {offsets = [0, 96], sizes = [1, 16], strides = [1, 1]} : vector<1x256xf32> to vector<1x16xf32>
    %73 = vector.extract_strided_slice %39 {offsets = [0, 112], sizes = [1, 16], strides = [1, 1]} : vector<1x256xf32> to vector<1x16xf32>
    %74 = vector.extract_strided_slice %39 {offsets = [0, 128], sizes = [1, 16], strides = [1, 1]} : vector<1x256xf32> to vector<1x16xf32>
    %75 = vector.extract_strided_slice %39 {offsets = [0, 144], sizes = [1, 16], strides = [1, 1]} : vector<1x256xf32> to vector<1x16xf32>
    %76 = vector.extract_strided_slice %39 {offsets = [0, 160], sizes = [1, 16], strides = [1, 1]} : vector<1x256xf32> to vector<1x16xf32>
    %77 = vector.extract_strided_slice %39 {offsets = [0, 176], sizes = [1, 16], strides = [1, 1]} : vector<1x256xf32> to vector<1x16xf32>
    %78 = vector.extract_strided_slice %39 {offsets = [0, 192], sizes = [1, 16], strides = [1, 1]} : vector<1x256xf32> to vector<1x16xf32>
    %79 = vector.extract_strided_slice %39 {offsets = [0, 208], sizes = [1, 16], strides = [1, 1]} : vector<1x256xf32> to vector<1x16xf32>
    %80 = vector.extract_strided_slice %39 {offsets = [0, 224], sizes = [1, 16], strides = [1, 1]} : vector<1x256xf32> to vector<1x16xf32>
    %81 = vector.extract_strided_slice %39 {offsets = [0, 240], sizes = [1, 16], strides = [1, 1]} : vector<1x256xf32> to vector<1x16xf32>
    %82 = tpu.concatenate %66, %67, %68, %69, %70, %71, %72, %73, %74, %75, %76, %77, %78, %79, %80, %81 in 0 : vector<1x16xf32>, vector<1x16xf32>, vector<1x16xf32>, vector<1x16xf32>, vector<1x16xf32>, vector<1x16xf32>, vector<1x16xf32>, vector<1x16xf32>, vector<1x16xf32>, vector<1x16xf32>, vector<1x16xf32>, vector<1x16xf32>, vector<1x16xf32>, vector<1x16xf32>, vector<1x16xf32>, vector<1x16xf32> -> vector<16x16xf32>
    %c0_i32_19 = arith.constant 0 : i32
    %83 = arith.sitofp %c0_i32_19 : i32 to f32
    %84 = vector.broadcast %83 : f32 to vector<3x16xf32>
    %85 = tpu.concatenate %84, %82 in 0 : vector<3x16xf32>, vector<16x16xf32> -> vector<19x16xf32>
    %86 = vector.broadcast %83 : f32 to vector<3x16xf32>
    %87 = tpu.concatenate %85, %86 in 0 : vector<19x16xf32>, vector<3x16xf32> -> vector<22x16xf32>
    %88 = vector.broadcast %83 : f32 to vector<22x3xf32>
    %89 = tpu.concatenate %88, %87 in 1 : vector<22x3xf32>, vector<22x16xf32> -> vector<22x19xf32>
    %90 = vector.broadcast %83 : f32 to vector<22x3xf32>
    %91 = tpu.concatenate %89, %90 in 1 : vector<22x19xf32>, vector<22x3xf32> -> vector<22x22xf32>
    %cst_20 = arith.constant 0.000000e+00 : f32
    %92 = vector.broadcast %cst_20 : f32 to vector<16x16xf32>
    %93 = vector.extract_strided_slice %65 {offsets = [0, 0], sizes = [16, 22], strides = [1, 1]} : vector<22x22xf32> to vector<16x22xf32>
    %c0_21 = arith.constant 0 : index
    %c0_22 = arith.constant 0 : index
    %c0_23 = arith.constant 0 : index
    %c0_24 = arith.constant 0 : index
    %94 = vector.load %arg6[%c0_21, %c0_22, %c0_23, %c0_24] : memref<2x7x22x16xf32, #tpu.memory_space<vmem>>, vector<1x1x22x16xf32>
    %95 = vector.shape_cast %94 : vector<1x1x22x16xf32> to vector<22x16xf32>
    %cst_25 = arith.constant dense<0.000000e+00> : vector<16x16xf32>
    %96 = tpu.matmul %93, %95, %cst_25 {dimension_numbers = #tpu.dot_dimension_numbers<[1], [0], [0], [1], [0, 0, 1, 1], [], []>} : vector<16x22xf32>, vector<22x16xf32>, vector<16x16xf32> -> vector<16x16xf32>
    %97 = arith.addf %92, %96 : vector<16x16xf32>
    %98 = vector.extract_strided_slice %91 {offsets = [0, 0], sizes = [16, 22], strides = [1, 1]} : vector<22x22xf32> to vector<16x22xf32>
    %c1 = arith.constant 1 : index
    %c0_26 = arith.constant 0 : index
    %c0_27 = arith.constant 0 : index
    %c0_28 = arith.constant 0 : index
    %99 = vector.load %arg6[%c1, %c0_26, %c0_27, %c0_28] : memref<2x7x22x16xf32, #tpu.memory_space<vmem>>, vector<1x1x22x16xf32>
    %100 = vector.shape_cast %99 : vector<1x1x22x16xf32> to vector<22x16xf32>
    %cst_29 = arith.constant dense<0.000000e+00> : vector<16x16xf32>
    %101 = tpu.matmul %98, %100, %cst_29 {dimension_numbers = #tpu.dot_dimension_numbers<[1], [0], [0], [1], [0, 0, 1, 1], [], []>} : vector<16x22xf32>, vector<22x16xf32>, vector<16x16xf32> -> vector<16x16xf32>
    %102 = arith.addf %97, %101 : vector<16x16xf32>
    %103 = vector.extract_strided_slice %65 {offsets = [1, 0], sizes = [16, 22], strides = [1, 1]} : vector<22x22xf32> to vector<16x22xf32>
    %c0_30 = arith.constant 0 : index
    %c1_31 = arith.constant 1 : index
    %c0_32 = arith.constant 0 : index
    %c0_33 = arith.constant 0 : index
    %104 = vector.load %arg6[%c0_30, %c1_31, %c0_32, %c0_33] : memref<2x7x22x16xf32, #tpu.memory_space<vmem>>, vector<1x1x22x16xf32>
    %105 = vector.shape_cast %104 : vector<1x1x22x16xf32> to vector<22x16xf32>
    %cst_34 = arith.constant dense<0.000000e+00> : vector<16x16xf32>
    %106 = tpu.matmul %103, %105, %cst_34 {dimension_numbers = #tpu.dot_dimension_numbers<[1], [0], [0], [1], [0, 0, 1, 1], [], []>} : vector<16x22xf32>, vector<22x16xf32>, vector<16x16xf32> -> vector<16x16xf32>
    %107 = arith.addf %102, %106 : vector<16x16xf32>
    %108 = vector.extract_strided_slice %91 {offsets = [1, 0], sizes = [16, 22], strides = [1, 1]} : vector<22x22xf32> to vector<16x22xf32>
    %c1_35 = arith.constant 1 : index
    %c1_36 = arith.constant 1 : index
    %c0_37 = arith.constant 0 : index
    %c0_38 = arith.constant 0 : index
    %109 = vector.load %arg6[%c1_35, %c1_36, %c0_37, %c0_38] : memref<2x7x22x16xf32, #tpu.memory_space<vmem>>, vector<1x1x22x16xf32>
    %110 = vector.shape_cast %109 : vector<1x1x22x16xf32> to vector<22x16xf32>
    %cst_39 = arith.constant dense<0.000000e+00> : vector<16x16xf32>
    %111 = tpu.matmul %108, %110, %cst_39 {dimension_numbers = #tpu.dot_dimension_numbers<[1], [0], [0], [1], [0, 0, 1, 1], [], []>} : vector<16x22xf32>, vector<22x16xf32>, vector<16x16xf32> -> vector<16x16xf32>
    %112 = arith.addf %107, %111 : vector<16x16xf32>
    %113 = vector.extract_strided_slice %65 {offsets = [2, 0], sizes = [16, 22], strides = [1, 1]} : vector<22x22xf32> to vector<16x22xf32>
    %c0_40 = arith.constant 0 : index
    %c2 = arith.constant 2 : index
    %c0_41 = arith.constant 0 : index
    %c0_42 = arith.constant 0 : index
    %114 = vector.load %arg6[%c0_40, %c2, %c0_41, %c0_42] : memref<2x7x22x16xf32, #tpu.memory_space<vmem>>, vector<1x1x22x16xf32>
    %115 = vector.shape_cast %114 : vector<1x1x22x16xf32> to vector<22x16xf32>
    %cst_43 = arith.constant dense<0.000000e+00> : vector<16x16xf32>
    %116 = tpu.matmul %113, %115, %cst_43 {dimension_numbers = #tpu.dot_dimension_numbers<[1], [0], [0], [1], [0, 0, 1, 1], [], []>} : vector<16x22xf32>, vector<22x16xf32>, vector<16x16xf32> -> vector<16x16xf32>
    %117 = arith.addf %112, %116 : vector<16x16xf32>
    %118 = vector.extract_strided_slice %91 {offsets = [2, 0], sizes = [16, 22], strides = [1, 1]} : vector<22x22xf32> to vector<16x22xf32>
    %c1_44 = arith.constant 1 : index
    %c2_45 = arith.constant 2 : index
    %c0_46 = arith.constant 0 : index
    %c0_47 = arith.constant 0 : index
    %119 = vector.load %arg6[%c1_44, %c2_45, %c0_46, %c0_47] : memref<2x7x22x16xf32, #tpu.memory_space<vmem>>, vector<1x1x22x16xf32>
    %120 = vector.shape_cast %119 : vector<1x1x22x16xf32> to vector<22x16xf32>
    %cst_48 = arith.constant dense<0.000000e+00> : vector<16x16xf32>
    %121 = tpu.matmul %118, %120, %cst_48 {dimension_numbers = #tpu.dot_dimension_numbers<[1], [0], [0], [1], [0, 0, 1, 1], [], []>} : vector<16x22xf32>, vector<22x16xf32>, vector<16x16xf32> -> vector<16x16xf32>
    %122 = arith.addf %117, %121 : vector<16x16xf32>
    %123 = vector.extract_strided_slice %65 {offsets = [3, 0], sizes = [16, 22], strides = [1, 1]} : vector<22x22xf32> to vector<16x22xf32>
    %c0_49 = arith.constant 0 : index
    %c3 = arith.constant 3 : index
    %c0_50 = arith.constant 0 : index
    %c0_51 = arith.constant 0 : index
    %124 = vector.load %arg6[%c0_49, %c3, %c0_50, %c0_51] : memref<2x7x22x16xf32, #tpu.memory_space<vmem>>, vector<1x1x22x16xf32>
    %125 = vector.shape_cast %124 : vector<1x1x22x16xf32> to vector<22x16xf32>
    %cst_52 = arith.constant dense<0.000000e+00> : vector<16x16xf32>
    %126 = tpu.matmul %123, %125, %cst_52 {dimension_numbers = #tpu.dot_dimension_numbers<[1], [0], [0], [1], [0, 0, 1, 1], [], []>} : vector<16x22xf32>, vector<22x16xf32>, vector<16x16xf32> -> vector<16x16xf32>
    %127 = arith.addf %122, %126 : vector<16x16xf32>
    %128 = vector.extract_strided_slice %91 {offsets = [3, 0], sizes = [16, 22], strides = [1, 1]} : vector<22x22xf32> to vector<16x22xf32>
    %c1_53 = arith.constant 1 : index
    %c3_54 = arith.constant 3 : index
    %c0_55 = arith.constant 0 : index
    %c0_56 = arith.constant 0 : index
    %129 = vector.load %arg6[%c1_53, %c3_54, %c0_55, %c0_56] : memref<2x7x22x16xf32, #tpu.memory_space<vmem>>, vector<1x1x22x16xf32>
    %130 = vector.shape_cast %129 : vector<1x1x22x16xf32> to vector<22x16xf32>
    %cst_57 = arith.constant dense<0.000000e+00> : vector<16x16xf32>
    %131 = tpu.matmul %128, %130, %cst_57 {dimension_numbers = #tpu.dot_dimension_numbers<[1], [0], [0], [1], [0, 0, 1, 1], [], []>} : vector<16x22xf32>, vector<22x16xf32>, vector<16x16xf32> -> vector<16x16xf32>
    %132 = arith.addf %127, %131 : vector<16x16xf32>
    %133 = vector.extract_strided_slice %65 {offsets = [4, 0], sizes = [16, 22], strides = [1, 1]} : vector<22x22xf32> to vector<16x22xf32>
    %c0_58 = arith.constant 0 : index
    %c4 = arith.constant 4 : index
    %c0_59 = arith.constant 0 : index
    %c0_60 = arith.constant 0 : index
    %134 = vector.load %arg6[%c0_58, %c4, %c0_59, %c0_60] : memref<2x7x22x16xf32, #tpu.memory_space<vmem>>, vector<1x1x22x16xf32>
    %135 = vector.shape_cast %134 : vector<1x1x22x16xf32> to vector<22x16xf32>
    %cst_61 = arith.constant dense<0.000000e+00> : vector<16x16xf32>
    %136 = tpu.matmul %133, %135, %cst_61 {dimension_numbers = #tpu.dot_dimension_numbers<[1], [0], [0], [1], [0, 0, 1, 1], [], []>} : vector<16x22xf32>, vector<22x16xf32>, vector<16x16xf32> -> vector<16x16xf32>
    %137 = arith.addf %132, %136 : vector<16x16xf32>
    %138 = vector.extract_strided_slice %91 {offsets = [4, 0], sizes = [16, 22], strides = [1, 1]} : vector<22x22xf32> to vector<16x22xf32>
    %c1_62 = arith.constant 1 : index
    %c4_63 = arith.constant 4 : index
    %c0_64 = arith.constant 0 : index
    %c0_65 = arith.constant 0 : index
    %139 = vector.load %arg6[%c1_62, %c4_63, %c0_64, %c0_65] : memref<2x7x22x16xf32, #tpu.memory_space<vmem>>, vector<1x1x22x16xf32>
    %140 = vector.shape_cast %139 : vector<1x1x22x16xf32> to vector<22x16xf32>
    %cst_66 = arith.constant dense<0.000000e+00> : vector<16x16xf32>
    %141 = tpu.matmul %138, %140, %cst_66 {dimension_numbers = #tpu.dot_dimension_numbers<[1], [0], [0], [1], [0, 0, 1, 1], [], []>} : vector<16x22xf32>, vector<22x16xf32>, vector<16x16xf32> -> vector<16x16xf32>
    %142 = arith.addf %137, %141 : vector<16x16xf32>
    %143 = vector.extract_strided_slice %65 {offsets = [5, 0], sizes = [16, 22], strides = [1, 1]} : vector<22x22xf32> to vector<16x22xf32>
    %c0_67 = arith.constant 0 : index
    %c5 = arith.constant 5 : index
    %c0_68 = arith.constant 0 : index
    %c0_69 = arith.constant 0 : index
    %144 = vector.load %arg6[%c0_67, %c5, %c0_68, %c0_69] : memref<2x7x22x16xf32, #tpu.memory_space<vmem>>, vector<1x1x22x16xf32>
    %145 = vector.shape_cast %144 : vector<1x1x22x16xf32> to vector<22x16xf32>
    %cst_70 = arith.constant dense<0.000000e+00> : vector<16x16xf32>
    %146 = tpu.matmul %143, %145, %cst_70 {dimension_numbers = #tpu.dot_dimension_numbers<[1], [0], [0], [1], [0, 0, 1, 1], [], []>} : vector<16x22xf32>, vector<22x16xf32>, vector<16x16xf32> -> vector<16x16xf32>
    %147 = arith.addf %142, %146 : vector<16x16xf32>
    %148 = vector.extract_strided_slice %91 {offsets = [5, 0], sizes = [16, 22], strides = [1, 1]} : vector<22x22xf32> to vector<16x22xf32>
    %c1_71 = arith.constant 1 : index
    %c5_72 = arith.constant 5 : index
    %c0_73 = arith.constant 0 : index
    %c0_74 = arith.constant 0 : index
    %149 = vector.load %arg6[%c1_71, %c5_72, %c0_73, %c0_74] : memref<2x7x22x16xf32, #tpu.memory_space<vmem>>, vector<1x1x22x16xf32>
    %150 = vector.shape_cast %149 : vector<1x1x22x16xf32> to vector<22x16xf32>
    %cst_75 = arith.constant dense<0.000000e+00> : vector<16x16xf32>
    %151 = tpu.matmul %148, %150, %cst_75 {dimension_numbers = #tpu.dot_dimension_numbers<[1], [0], [0], [1], [0, 0, 1, 1], [], []>} : vector<16x22xf32>, vector<22x16xf32>, vector<16x16xf32> -> vector<16x16xf32>
    %152 = arith.addf %147, %151 : vector<16x16xf32>
    %153 = vector.extract_strided_slice %65 {offsets = [6, 0], sizes = [16, 22], strides = [1, 1]} : vector<22x22xf32> to vector<16x22xf32>
    %c0_76 = arith.constant 0 : index
    %c6 = arith.constant 6 : index
    %c0_77 = arith.constant 0 : index
    %c0_78 = arith.constant 0 : index
    %154 = vector.load %arg6[%c0_76, %c6, %c0_77, %c0_78] : memref<2x7x22x16xf32, #tpu.memory_space<vmem>>, vector<1x1x22x16xf32>
    %155 = vector.shape_cast %154 : vector<1x1x22x16xf32> to vector<22x16xf32>
    %cst_79 = arith.constant dense<0.000000e+00> : vector<16x16xf32>
    %156 = tpu.matmul %153, %155, %cst_79 {dimension_numbers = #tpu.dot_dimension_numbers<[1], [0], [0], [1], [0, 0, 1, 1], [], []>} : vector<16x22xf32>, vector<22x16xf32>, vector<16x16xf32> -> vector<16x16xf32>
    %157 = arith.addf %152, %156 : vector<16x16xf32>
    %158 = vector.extract_strided_slice %91 {offsets = [6, 0], sizes = [16, 22], strides = [1, 1]} : vector<22x22xf32> to vector<16x22xf32>
    %c1_80 = arith.constant 1 : index
    %c6_81 = arith.constant 6 : index
    %c0_82 = arith.constant 0 : index
    %c0_83 = arith.constant 0 : index
    %159 = vector.load %arg6[%c1_80, %c6_81, %c0_82, %c0_83] : memref<2x7x22x16xf32, #tpu.memory_space<vmem>>, vector<1x1x22x16xf32>
    %160 = vector.shape_cast %159 : vector<1x1x22x16xf32> to vector<22x16xf32>
    %cst_84 = arith.constant dense<0.000000e+00> : vector<16x16xf32>
    %161 = tpu.matmul %158, %160, %cst_84 {dimension_numbers = #tpu.dot_dimension_numbers<[1], [0], [0], [1], [0, 0, 1, 1], [], []>} : vector<16x22xf32>, vector<22x16xf32>, vector<16x16xf32> -> vector<16x16xf32>
    %162 = arith.addf %157, %161 : vector<16x16xf32>
    %c0_85 = arith.constant 0 : index
    %163 = memref.load %arg7[%c0_85] : memref<1xf32, #tpu.memory_space<smem>>
    %164 = vector.broadcast %163 : f32 to vector<16x16xf32>
    %165 = arith.addf %162, %164 : vector<16x16xf32>
    %166 = vector.shape_cast %165 : vector<16x16xf32> to vector<1x16x16xf32>
    %cst_86 = arith.constant dense<0.000000e+00> : vector<1xf32>
    %167 = vector.multi_reduction <add>, %166, %cst_86 [1, 2] : vector<1x16x16xf32> to vector<1xf32>
    %168 = vector.shape_cast %167 : vector<1xf32> to vector<1x1x1xf32>
    %169 = vector.extract %168[0, 0, 0] : f32 from vector<1x1x1xf32>
    %cst_87 = arith.constant 2.560000e+02 : f32
    %170 = arith.divf %169, %cst_87 : f32
    %171 = vector.broadcast %170 : f32 to vector<16x16xf32>
    %172 = arith.subf %165, %171 : vector<16x16xf32>
    %173 = arith.mulf %172, %172 : vector<16x16xf32>
    %174 = vector.shape_cast %173 : vector<16x16xf32> to vector<1x16x16xf32>
    %cst_88 = arith.constant dense<0.000000e+00> : vector<1xf32>
    %175 = vector.multi_reduction <add>, %174, %cst_88 [1, 2] : vector<1x16x16xf32> to vector<1xf32>
    %176 = vector.shape_cast %175 : vector<1xf32> to vector<1x1x1xf32>
    %177 = vector.extract %176[0, 0, 0] : f32 from vector<1x1x1xf32>
    %cst_89 = arith.constant 2.560000e+02 : f32
    %178 = arith.divf %177, %cst_89 : f32
    %179 = vector.broadcast %170 : f32 to vector<16x16xf32>
    %180 = arith.subf %165, %179 : vector<16x16xf32>
    %cst_90 = arith.constant 9.99999974E-6 : f32
    %181 = arith.addf %178, %cst_90 : f32
    %182 = math.rsqrt %181 : f32
    %183 = vector.broadcast %182 : f32 to vector<16x16xf32>
    %184 = arith.mulf %180, %183 : vector<16x16xf32>
    %185 = arith.negf %184 : vector<16x16xf32>
    %186 = math.exp %185 : vector<16x16xf32>
    %cst_91 = arith.constant 1.000000e+00 : f32
    %187 = vector.broadcast %cst_91 : f32 to vector<16x16xf32>
    %188 = arith.addf %187, %186 : vector<16x16xf32>
    %189 = arith.divf %187, %188 : vector<16x16xf32>
    %190 = vector.extract_strided_slice %189 {offsets = [0, 0], sizes = [1, 16], strides = [1, 1]} : vector<16x16xf32> to vector<1x16xf32>
    %191 = vector.extract_strided_slice %189 {offsets = [1, 0], sizes = [1, 16], strides = [1, 1]} : vector<16x16xf32> to vector<1x16xf32>
    %192 = vector.extract_strided_slice %189 {offsets = [2, 0], sizes = [1, 16], strides = [1, 1]} : vector<16x16xf32> to vector<1x16xf32>
    %193 = vector.extract_strided_slice %189 {offsets = [3, 0], sizes = [1, 16], strides = [1, 1]} : vector<16x16xf32> to vector<1x16xf32>
    %194 = vector.extract_strided_slice %189 {offsets = [4, 0], sizes = [1, 16], strides = [1, 1]} : vector<16x16xf32> to vector<1x16xf32>
    %195 = vector.extract_strided_slice %189 {offsets = [5, 0], sizes = [1, 16], strides = [1, 1]} : vector<16x16xf32> to vector<1x16xf32>
    %196 = vector.extract_strided_slice %189 {offsets = [6, 0], sizes = [1, 16], strides = [1, 1]} : vector<16x16xf32> to vector<1x16xf32>
    %197 = vector.extract_strided_slice %189 {offsets = [7, 0], sizes = [1, 16], strides = [1, 1]} : vector<16x16xf32> to vector<1x16xf32>
    %198 = vector.extract_strided_slice %189 {offsets = [8, 0], sizes = [1, 16], strides = [1, 1]} : vector<16x16xf32> to vector<1x16xf32>
    %199 = vector.extract_strided_slice %189 {offsets = [9, 0], sizes = [1, 16], strides = [1, 1]} : vector<16x16xf32> to vector<1x16xf32>
    %200 = vector.extract_strided_slice %189 {offsets = [10, 0], sizes = [1, 16], strides = [1, 1]} : vector<16x16xf32> to vector<1x16xf32>
    %201 = vector.extract_strided_slice %189 {offsets = [11, 0], sizes = [1, 16], strides = [1, 1]} : vector<16x16xf32> to vector<1x16xf32>
    %202 = vector.extract_strided_slice %189 {offsets = [12, 0], sizes = [1, 16], strides = [1, 1]} : vector<16x16xf32> to vector<1x16xf32>
    %203 = vector.extract_strided_slice %189 {offsets = [13, 0], sizes = [1, 16], strides = [1, 1]} : vector<16x16xf32> to vector<1x16xf32>
    %204 = vector.extract_strided_slice %189 {offsets = [14, 0], sizes = [1, 16], strides = [1, 1]} : vector<16x16xf32> to vector<1x16xf32>
    %205 = vector.extract_strided_slice %189 {offsets = [15, 0], sizes = [1, 16], strides = [1, 1]} : vector<16x16xf32> to vector<1x16xf32>
    %206 = tpu.concatenate %190, %191, %192, %193, %194, %195, %196, %197, %198, %199, %200, %201, %202, %203, %204, %205 in 1 : vector<1x16xf32>, vector<1x16xf32>, vector<1x16xf32>, vector<1x16xf32>, vector<1x16xf32>, vector<1x16xf32>, vector<1x16xf32>, vector<1x16xf32>, vector<1x16xf32>, vector<1x16xf32>, vector<1x16xf32>, vector<1x16xf32>, vector<1x16xf32>, vector<1x16xf32>, vector<1x16xf32>, vector<1x16xf32> -> vector<1x256xf32>
    %207 = vector.broadcast %206 : vector<1x256xf32> to vector<32x256xf32>
    %208 = arith.mulf %33, %207 : vector<32x256xf32>
    %c0_92 = arith.constant 0 : index
    %c0_93 = arith.constant 0 : index
    %c0_94 = arith.constant 0 : index
    %209 = vector.load %arg8[%c0_92, %c0_93, %c0_94] : memref<1x32x256xf32, #tpu.memory_space<vmem>>, vector<1x32x256xf32>
    %210 = vector.shape_cast %209 : vector<1x32x256xf32> to vector<32x256xf32>
    %211 = vector.shape_cast %208 : vector<32x256xf32> to vector<1x32x256xf32>
    tpu.vector_store %arg8[%c0_92, %c0_93, %c0_94], %211 {strides = array<i32>} : memref<1x32x256xf32, #tpu.memory_space<vmem>>, vector<1x32x256xf32>,
    return
  }
  func.func @transform_0(%arg0: i32) -> (i32, i32, i32) {
    %c0_i32 = arith.constant 0 : i32
    %c0_i32_0 = arith.constant 0 : i32
    %c0_i32_1 = arith.constant 0 : i32
    return %arg0, %c0_i32, %c0_i32_0 : i32, i32, i32
  }
  func.func @transform_1(%arg0: i32) -> (i32, i32) {
    %c0_i32 = arith.constant 0 : i32
    %c0_i32_0 = arith.constant 0 : i32
    %c0_i32_1 = arith.constant 0 : i32
    return %c0_i32, %c0_i32_0 : i32, i32
  }
  func.func @transform_2(%arg0: i32) -> (i32, i32) {
    %c0_i32 = arith.constant 0 : i32
    %c0_i32_0 = arith.constant 0 : i32
    %c0_i32_1 = arith.constant 0 : i32
    return %c0_i32, %c0_i32_0 : i32, i32
  }
  func.func @transform_3(%arg0: i32) -> (i32, i32) {
    %c0_i32 = arith.constant 0 : i32
    %c0_i32_0 = arith.constant 0 : i32
    %c0_i32_1 = arith.constant 0 : i32
    return %c0_i32, %c0_i32_0 : i32, i32
  }
  func.func @transform_4(%arg0: i32) -> (i32, i32) {
    %c0_i32 = arith.constant 0 : i32
    %c0_i32_0 = arith.constant 0 : i32
    %c0_i32_1 = arith.constant 0 : i32
    return %c0_i32, %c0_i32_0 : i32, i32
  }
  func.func @transform_5(%arg0: i32) -> (i32, i32, i32, i32) {
    %c0_i32 = arith.constant 0 : i32
    %c0_i32_0 = arith.constant 0 : i32
    %c0_i32_1 = arith.constant 0 : i32
    %c0_i32_2 = arith.constant 0 : i32
    %c0_i32_3 = arith.constant 0 : i32
    return %c0_i32, %c0_i32_0, %c0_i32_1, %c0_i32_2 : i32, i32, i32, i32
  }
  func.func @transform_6(%arg0: i32) -> i32 {
    %c0_i32 = arith.constant 0 : i32
    %c0_i32_0 = arith.constant 0 : i32
    return %c0_i32 : i32
  }
  func.func @transform_7(%arg0: i32) -> (i32, i32, i32) {
    %c0_i32 = arith.constant 0 : i32
    %c0_i32_0 = arith.constant 0 : i32
    %c0_i32_1 = arith.constant 0 : i32
    return %arg0, %c0_i32, %c0_i32_0 : i32, i32, i32
  }
}

</mosaic_0001>

<llo_original>
// kernel: tpu_custom_call.1
$region0: #{tpu_custom_call.1}
  #allocation0 [shape = 'u32[]', space=smem, size = 0x4, offset = 0x4, fixed_abs, tag = 'smem constant byte address 0x4 - core index']
  #allocation1 [shape = 'u32[144,128]{1,0:T(1,128)}', space=vmem, size = 0x12000, scoped, tag = 'internal scratch']
  #allocation2 [shape = 'f32[1]{0:T(128)S(6)}', space=smem, size = 0x200, scoped, tag = 'scoped memory for tpu_custom_call.1']
  %s0 = inlined_call_operand.vmem [shape: f32[2,32,256], index: 0, kind: input, shape index: {}]
  %s1 = inlined_call_operand.vmem [shape: f32[32,2], index: 1, kind: input, shape index: {}]
  %s2 = inlined_call_operand.vmem [shape: f32[1,2], index: 2, kind: input, shape index: {}]
  %s3 = inlined_call_operand.vmem [shape: f32[2,32], index: 3, kind: input, shape index: {}]
  %s4 = inlined_call_operand.vmem [shape: f32[1,32], index: 4, kind: input, shape index: {}]
  %s5 = inlined_call_operand.vmem [shape: f32[2,7,22,16], index: 5, kind: input, shape index: {}]
  %s6 = inlined_call_operand.<no memory space> [shape: f32[1], index: 6, kind: input, shape index: {}]
  %s7 = inlined_call_operand.hbm [shape: f32[2,32,256], index: 7, kind: output, shape index: {}]
  %s8 = sld [smem:[#allocation0]]
  $region61: #{tpu_custom_call.1} parent=0
    _
  %s10 = ssub.s32 1, %s8
  %s11 = scalar_select 0, %s10, %s8
  %12 = sst [smem:[#allocation2]] %s6
  $region1: #{tpu_custom_call.1} parent=0
    #allocation3 [shape = 'u8[65536]{0}', space=vmem, size = 0x10000, scoped, tag = 'output window, operand 0']
    #allocation4 [shape = 's32[2]{0}', space=sflag, size = 0x8, scoped, tag = 'scoped memory for tpu_custom_call.1']
    %13 = vsyncpa [#allocation4], 0
    %s14 = scalar_lea.sflag [#allocation4], 1
    %15 = vsyncpa %s14, 0
    loop: start=0, step=1, limit=4
    $region2: #{tpu_custom_call.1} parent=1 // loop_pre_header
      _
    $region3: #{tpu_custom_call.1} parent=1 // loop_header
      %s17 = sphi 0, %s21
      %p18 = scmp.ge.s32.totalorder %s17, 4
      %s27 = sphi 0, %s29
      %s30 = sphi 0, %s27
      %s31 = sphi 0, %s30
      %s47 = sphi 0, %s31
      %s51 = sphi 0, %s51
      %s53 = sphi 0, %s51
      %s54 = sphi 0, %s53
      %s68 = sphi 0, %s54
      %s72 = sphi 0, %s72
      %s74 = sphi 0, %s72
      %s75 = sphi 0, %s74
      %s89 = sphi 0, %s75
      %s93 = sphi 0, %s93
      %s95 = sphi 0, %s93
      %s96 = sphi 0, %s95
      %s110 = sphi 0, %s96
      %s114 = sphi 0, %s114
      %s116 = sphi 0, %s114
      %s117 = sphi 0, %s116
      %s131 = sphi 0, %s117
      %s135 = sphi 0, %s135
      %s137 = sphi 0, %s135
      %s138 = sphi 0, %s137
      %s152 = sphi 0, %s138
      %s156 = sphi 0, %s156
      %s158 = sphi 0, %s156
      %s159 = sphi 0, %s158
      %s173 = sphi 0, %s159
      %s179 = sphi 0, %s181
      %s182 = sphi 0, %s179
      %s183 = sphi 0, %s182
      %s199 = sphi 0, %s183
    $region4: #{tpu_custom_call.1} parent=1 // loop_header_branch
      %20 = sbr.rel (%p18) target = $region8
    $region5: #{tpu_custom_call.1} parent=1 // loop_body
      %s22 = ssub.s32 %s17, 1
      %s23 = ssub.s32 %s17, 2
      %s24 = sadd.s32 %s17, 1
      %s25 = ssub.s32 %s17, %s24
      %p26 = scmp.eq.s32.totalorder %s25, 0
      %s28 = sadd.s32 %s27, 1
      %s29 = scalar_select %p26, %s27, %s28
      %p32 = pneg %p26
      %p33 = scmp.eq.s32.totalorder %s17, 1
      %p34 = por %p32, %p33
      %p35 = scmp.ne.s32.totalorder %s27, %s30
      %p36 = scmp.eq.s32.totalorder %s17, 0
      %p37 = por %p35, %p36
      %p38 = scmp.ne.s32.totalorder %s27, %s30
      %p39 = scmp.eq.s32.totalorder %s22, 1
      %p40 = por %p38, %p39
      %p41 = scmp.ne.s32.totalorder %s30, %s31
      %p42 = scmp.eq.s32.totalorder %s22, 0
      %p43 = por %p41, %p42
      %p44 = scmp.ne.s32.totalorder %s30, %s31
      %p45 = scmp.eq.s32.totalorder %s23, 1
      %p46 = por %p44, %p45
      %p48 = scmp.ne.s32.totalorder %s31, %s47
      %p49 = scmp.eq.s32.totalorder %s23, 0
      %p50 = por %p48, %p49
      %s52 = sadd.s32 %s51, 1
      %p55 = scmp.eq.s32.totalorder %s17, 1
      %p56 = scmp.ne.s32.totalorder %s51, %s53
      %p57 = scmp.eq.s32.totalorder %s17, 0
      %p58 = por %p56, %p57
      %p59 = scmp.ne.s32.totalorder %s51, %s53
      %p60 = scmp.eq.s32.totalorder %s22, 1
      %p61 = por %p59, %p60
      %p62 = scmp.ne.s32.totalorder %s53, %s54
      %p63 = scmp.eq.s32.totalorder %s22, 0
      %p64 = por %p62, %p63
      %p65 = scmp.ne.s32.totalorder %s53, %s54
      %p66 = scmp.eq.s32.totalorder %s23, 1
      %p67 = por %p65, %p66
      %p69 = scmp.ne.s32.totalorder %s54, %s68
      %p70 = scmp.eq.s32.totalorder %s23, 0
      %p71 = por %p69, %p70
      %s73 = sadd.s32 %s72, 1
      %p76 = scmp.eq.s32.totalorder %s17, 1
      %p77 = scmp.ne.s32.totalorder %s72, %s74
      %p78 = scmp.eq.s32.totalorder %s17, 0
      %p79 = por %p77, %p78
      %p80 = scmp.ne.s32.totalorder %s72, %s74
      %p81 = scmp.eq.s32.totalorder %s22, 1
      %p82 = por %p80, %p81
      %p83 = scmp.ne.s32.totalorder %s74, %s75
      %p84 = scmp.eq.s32.totalorder %s22, 0
      %p85 = por %p83, %p84
      %p86 = scmp.ne.s32.totalorder %s74, %s75
      %p87 = scmp.eq.s32.totalorder %s23, 1
      %p88 = por %p86, %p87
      %p90 = scmp.ne.s32.totalorder %s75, %s89
      %p91 = scmp.eq.s32.totalorder %s23, 0
      %p92 = por %p90, %p91
      %s94 = sadd.s32 %s93, 1
      %p97 = scmp.eq.s32.totalorder %s17, 1
      %p98 = scmp.ne.s32.totalorder %s93, %s95
      %p99 = scmp.eq.s32.totalorder %s17, 0
      %p100 = por %p98, %p99
      %p101 = scmp.ne.s32.totalorder %s93, %s95
      %p102 = scmp.eq.s32.totalorder %s22, 1
      %p103 = por %p101, %p102
      %p104 = scmp.ne.s32.totalorder %s95, %s96
      %p105 = scmp.eq.s32.totalorder %s22, 0
      %p106 = por %p104, %p105
      %p107 = scmp.ne.s32.totalorder %s95, %s96
      %p108 = scmp.eq.s32.totalorder %s23, 1
      %p109 = por %p107, %p108
      %p111 = scmp.ne.s32.totalorder %s96, %s110
      %p112 = scmp.eq.s32.totalorder %s23, 0
      %p113 = por %p111, %p112
      %s115 = sadd.s32 %s114, 1
      %p118 = scmp.eq.s32.totalorder %s17, 1
      %p119 = scmp.ne.s32.totalorder %s114, %s116
      %p120 = scmp.eq.s32.totalorder %s17, 0
      %p121 = por %p119, %p120
      %p122 = scmp.ne.s32.totalorder %s114, %s116
      %p123 = scmp.eq.s32.totalorder %s22, 1
      %p124 = por %p122, %p123
      %p125 = scmp.ne.s32.totalorder %s116, %s117
      %p126 = scmp.eq.s32.totalorder %s22, 0
      %p127 = por %p125, %p126
      %p128 = scmp.ne.s32.totalorder %s116, %s117
      %p129 = scmp.eq.s32.totalorder %s23, 1
      %p130 = por %p128, %p129
      %p132 = scmp.ne.s32.totalorder %s117, %s131
      %p133 = scmp.eq.s32.totalorder %s23, 0
      %p134 = por %p132, %p133
      %s136 = sadd.s32 %s135, 1
      %p139 = scmp.eq.s32.totalorder %s17, 1
      %p140 = scmp.ne.s32.totalorder %s135, %s137
      %p141 = scmp.eq.s32.totalorder %s17, 0
      %p142 = por %p140, %p141
      %p143 = scmp.ne.s32.totalorder %s135, %s137
      %p144 = scmp.eq.s32.totalorder %s22, 1
      %p145 = por %p143, %p144
      %p146 = scmp.ne.s32.totalorder %s137, %s138
      %p147 = scmp.eq.s32.totalorder %s22, 0
      %p148 = por %p146, %p147
      %p149 = scmp.ne.s32.totalorder %s137, %s138
      %p150 = scmp.eq.s32.totalorder %s23, 1
      %p151 = por %p149, %p150
      %p153 = scmp.ne.s32.totalorder %s138, %s152
      %p154 = scmp.eq.s32.totalorder %s23, 0
      %p155 = por %p153, %p154
      %s157 = sadd.s32 %s156, 1
      %p160 = scmp.eq.s32.totalorder %s17, 1
      %p161 = scmp.ne.s32.totalorder %s156, %s158
      %p162 = scmp.eq.s32.totalorder %s17, 0
      %p163 = por %p161, %p162
      %p164 = scmp.ne.s32.totalorder %s156, %s158
      %p165 = scmp.eq.s32.totalorder %s22, 1
      %p166 = por %p164, %p165
      %p167 = scmp.ne.s32.totalorder %s158, %s159
      %p168 = scmp.eq.s32.totalorder %s22, 0
      %p169 = por %p167, %p168
      %p170 = scmp.ne.s32.totalorder %s158, %s159
      %p171 = scmp.eq.s32.totalorder %s23, 1
      %p172 = por %p170, %p171
      %p174 = scmp.ne.s32.totalorder %s159, %s173
      %p175 = scmp.eq.s32.totalorder %s23, 0
      %p176 = por %p174, %p175
      %s177 = ssub.s32 %s17, %s24
      %p178 = scmp.eq.s32.totalorder %s177, 0
      %s180 = sadd.s32 %s179, 1
      %s181 = scalar_select %p178, %s179, %s180
      %p184 = pneg %p178
      %p185 = scmp.eq.s32.totalorder %s17, 1
      %p186 = por %p184, %p185
      %p187 = scmp.ne.s32.totalorder %s179, %s182
      %p188 = scmp.eq.s32.totalorder %s17, 0
      %p189 = por %p187, %p188
      %p190 = scmp.ne.s32.totalorder %s179, %s182
      %p191 = scmp.eq.s32.totalorder %s22, 1
      %p192 = por %p190, %p191
      %p193 = scmp.ne.s32.totalorder %s182, %s183
      %p194 = scmp.eq.s32.totalorder %s22, 0
      %p195 = por %p193, %p194
      %p196 = scmp.ne.s32.totalorder %s182, %s183
      %p197 = scmp.eq.s32.totalorder %s23, 1
      %p198 = por %p196, %p197
      %p200 = scmp.ne.s32.totalorder %s183, %s199
      %p201 = scmp.eq.s32.totalorder %s23, 0
      %p202 = por %p200, %p201
      %p203 = scmp.le.s32.totalorder 1, %s17
      %p204 = scmp.lt.s32.totalorder %s17, 3
      %p205 = pnand %p203, %p204
      %p206 = pneg %p205
      // Predicated region
      $region9: #{tpu_custom_call.1} parent=5 // pred_check
        _
      $region10: #{tpu_custom_call.1} parent=5 // pred_check_branch
        %208 = sbr.rel (%p205) target = $region12
      $region11: #{tpu_custom_call.1} parent=5 // pred_region
        %s209 = ssub.s32 %s17, 1
        // Predicated region
        $region13: #{tpu_custom_call.1} parent=11 // pred_check
          %p210 = pneg %p64
        $region14: #{tpu_custom_call.1} parent=11 // pred_check_branch
          %212 = sbr.rel (%p210) target = $region16
        $region15: #{tpu_custom_call.1} parent=11 // pred_region
          _
        $region16: #{tpu_custom_call.1} parent=11 // pred_fallthru
          _
        // Predicated region
        $region17: #{tpu_custom_call.1} parent=11 // pred_check
          %p213 = pneg %p85
        $region18: #{tpu_custom_call.1} parent=11 // pred_check_branch
          %215 = sbr.rel (%p213) target = $region20
        $region19: #{tpu_custom_call.1} parent=11 // pred_region
          _
        $region20: #{tpu_custom_call.1} parent=11 // pred_fallthru
          _
        // Predicated region
        $region21: #{tpu_custom_call.1} parent=11 // pred_check
          %p216 = pneg %p106
        $region22: #{tpu_custom_call.1} parent=11 // pred_check_branch
          %218 = sbr.rel (%p216) target = $region24
        $region23: #{tpu_custom_call.1} parent=11 // pred_region
          _
        $region24: #{tpu_custom_call.1} parent=11 // pred_fallthru
          _
        // Predicated region
        $region25: #{tpu_custom_call.1} parent=11 // pred_check
          %p219 = pneg %p127
        $region26: #{tpu_custom_call.1} parent=11 // pred_check_branch
          %221 = sbr.rel (%p219) target = $region28
        $region27: #{tpu_custom_call.1} parent=11 // pred_region
          _
        $region28: #{tpu_custom_call.1} parent=11 // pred_fallthru
          _
        // Predicated region
        $region29: #{tpu_custom_call.1} parent=11 // pred_check
          %p222 = pneg %p148
        $region30: #{tpu_custom_call.1} parent=11 // pred_check_branch
          %224 = sbr.rel (%p222) target = $region32
        $region31: #{tpu_custom_call.1} parent=11 // pred_region
          _
        $region32: #{tpu_custom_call.1} parent=11 // pred_fallthru
          _
        // Predicated region
        $region33: #{tpu_custom_call.1} parent=11 // pred_check
          %p225 = pneg %p169
        $region34: #{tpu_custom_call.1} parent=11 // pred_check_branch
          %227 = sbr.rel (%p225) target = $region36
        $region35: #{tpu_custom_call.1} parent=11 // pred_region
          _
        $region36: #{tpu_custom_call.1} parent=11 // pred_fallthru
          _
      $region12: #{tpu_custom_call.1} parent=5 // pred_fallthru
        _
      %p228 = scmp.lt.s32.totalorder %s17, 2
      // Predicated region
      $region37: #{tpu_custom_call.1} parent=5 // pred_check
        %p229 = pneg %p228
      $region38: #{tpu_custom_call.1} parent=5 // pred_check_branch
        %231 = sbr.rel (%p229) target = $region40
      $region39: #{tpu_custom_call.1} parent=5 // pred_region
        // Predicated region
        $region41: #{tpu_custom_call.1} parent=39 // pred_check
          %p232 = pneg %p37
        $region42: #{tpu_custom_call.1} parent=39 // pred_check_branch
          %234 = sbr.rel (%p232) target = $region44
        $region43: #{tpu_custom_call.1} parent=39 // pred_region
          %p235 = scmp.lt.s32.totalorder %s17, 1
          %s236 = scalar_select %p235, %s17, 1
          %s237 = smul.addr %s236, 8
          %s238 = smul.addr %s237, 8
          %s239 = scalar_lea.vmem %s0, %s238
        $region44: #{tpu_custom_call.1} parent=39 // pred_fallthru
          _
      $region40: #{tpu_custom_call.1} parent=5 // pred_fallthru
        _
      %p240 = scmp.le.s32.totalorder 1, %s17
      %p241 = scmp.lt.s32.totalorder %s17, 3
      %p242 = pnand %p240, %p241
      %p243 = pneg %p242
      // Predicated region
      $region45: #{tpu_custom_call.1} parent=5 // pred_check
        _
      $region46: #{tpu_custom_call.1} parent=5 // pred_check_branch
        %245 = sbr.rel (%p242) target = $region48
      $region47: #{tpu_custom_call.1} parent=5 // pred_region
        %s246 = ssub.s32 %s17, 1
        %p247 = scmp.lt.s32.totalorder %s22, 1
        %s248 = scalar_select %p247, %s22, 1
        %s249 = smul.addr %s248, 8
        %s250 = smul.addr %s249, 8
        %s251 = scalar_lea.vmem %s0, %s250
        %p252 = pneg %p43
        %p253 = pneg %p40
        %p254 = pneg %p64
        %p255 = pneg %p61
        %p256 = pneg %p85
        %p257 = pneg %p82
        %p258 = pneg %p106
        %p259 = pneg %p103
        %p260 = pneg %p127
        %p261 = pneg %p124
        %p262 = pneg %p148
        %p263 = pneg %p145
        %p264 = pneg %p169
        %p265 = pneg %p166
        %p266 = pneg %p195
        %p267 = pneg %p192
        %s268 = sand.u32 %s182, 1
        %s269 = scalar_lea.sflag [#allocation4], %s268
        %s270 = sand.u32 %s182, 1
        %s271 = smul.addr %s270, 64
        %s272 = scalar_lea.vmem [#allocation3], %s271
        %p273 = scmp.lt.s32.totalorder %s22, 1
        %s274 = scalar_select %p273, %s22, 1
        %s275 = smul.addr %s274, 8
        %s276 = smul.addr %s275, 8
        %s277 = scalar_lea.vmem %s0, %s276
        %v278 = vld [vmem:[%s277] sm:$0xff]
        %v279 = vld [vmem:[%s277 + $0x8] sm:$0xff]
        %v280 = vld [vmem:[%s277 + $0x10] sm:$0xff]
        %v281 = vld [vmem:[%s277 + $0x18] sm:$0xff]
        %v282 = vld [vmem:[%s277 + $0x20] sm:$0xff]
        %v283 = vld [vmem:[%s277 + $0x28] sm:$0xff]
        %v284 = vld [vmem:[%s277 + $0x30] sm:$0xff]
        %v285 = vld [vmem:[%s277 + $0x38] sm:$0xff]
        %v286 = vadd.f32 %v278, %v279
        %287 = vadd.xlane.f32.xlu0 %v286
        %v288 = vpop.xlane.xlu0 %287
        %v289 = vadd.f32 %v280, %v281
        %290 = vadd.xlane.f32.xlu0 %v289
        %v291 = vpop.xlane.xlu0 %290
        %v292 = vadd.f32 %v282, %v283
        %293 = vadd.xlane.f32.xlu0 %v292
        %v294 = vpop.xlane.xlu0 %293
        %v295 = vadd.f32 %v284, %v285
        %296 = vadd.xlane.f32.xlu0 %v295
        %v297 = vpop.xlane.xlu0 %296
        %v298 = vrcp.pop 256.0
        %v299 = vmul.f32 %v288, %v298
        %v300 = vmul.f32 %v291, %v298
        %v301 = vmul.f32 %v294, %v298
        %v302 = vmul.f32 %v297, %v298
        %v303 = vmax.f32 %v278, %v279
        %304 = vmax.xlane.f32.xlu0 %v303
        %v305 = vpop.xlane.xlu0 %304
        %v306 = vmax.f32 %v280, %v281
        %307 = vmax.xlane.f32.xlu0 %v306
        %v308 = vpop.xlane.xlu0 %307
        %v309 = vmax.f32 %v282, %v283
        %310 = vmax.xlane.f32.xlu0 %v309
        %v311 = vpop.xlane.xlu0 %310
        %v312 = vmax.f32 %v284, %v285
        %313 = vmax.xlane.f32.xlu0 %v312
        %v314 = vpop.xlane.xlu0 %313
        %v319 = vlaneseq
        %v320 = vand.u32 %v319, 127
        %v321 = vlaneseq
        %v322 = vshrl.u32 %v321, 7
        %v323 = vsub.s32 %v320, %v322
        %v324 = vrot.slane %v299, %v323
        %v325 = vadd.s32 %v320, 4294967288
        %v326 = vlaneseq
        %v327 = vshrl.u32 %v326, 7
        %v328 = vsub.s32 %v325, %v327
        %v329 = vrot.slane %v300, %v328
        %vm330 = vcmask 130112
        %v331 = vsel %vm330, %v329, %v324
        %v332 = vadd.s32 %v320, 4294967280
        %v333 = vlaneseq
        %v334 = vshrl.u32 %v333, 7
        %v335 = vsub.s32 %v332, %v334
        %v336 = vrot.slane %v301, %v335
        %vm337 = vcmask 195712
        %v338 = vsel %vm337, %v336, %v331
        %v339 = vadd.s32 %v320, 4294967272
        %v340 = vlaneseq
        %v341 = vshrl.u32 %v340, 7
        %v342 = vsub.s32 %v339, %v341
        %v343 = vrot.slane %v302, %v342
        %vm344 = vcmask 261312
        %v345 = vsel %vm344, %v343, %v338
        %v351 = vlaneseq
        %v352 = vshrl.u32 %v351, 7
        %v353 = vsub.s32 %v320, %v352
        %v354 = vrot.slane %v305, %v353
        %v355 = vlaneseq
        %v356 = vshrl.u32 %v355, 7
        %v357 = vsub.s32 %v325, %v356
        %v358 = vrot.slane %v308, %v357
        %v359 = vsel %vm330, %v358, %v354
        %v360 = vlaneseq
        %v361 = vshrl.u32 %v360, 7
        %v362 = vsub.s32 %v332, %v361
        %v363 = vrot.slane %v311, %v362
        %v364 = vsel %vm337, %v363, %v359
        %v365 = vlaneseq
        %v366 = vshrl.u32 %v365, 7
        %v367 = vsub.s32 %v339, %v366
        %v368 = vrot.slane %v314, %v367
        %v369 = vsel %vm344, %v368, %v364
        %vm371 = vcmask 1040384
        %v372 = vsel %vm371, %v345, %v369
        %v373 = vld [vmem:[%s1] sm:$0xff]
        %v374 = vld [vmem:[%s1 + $0x8] sm:$0xff]
        %v375 = vld [vmem:[%s1 + $0x10] sm:$0xff]
        %v376 = vld [vmem:[%s1 + $0x18] sm:$0xff]
        %v377 = vld [vmem:[%s2] sm:$0x1]
        %v379 = vlaneseq
        %v380 = vshrl.u32 %v379, 7
        %v381 = vsub.s32 0, %v380
        %v382 = vrot.slane %v377, %v381
        %vm384 = vcmask 261120
        %v386 = vsel %vm384, %v372, 0
        %388 = vmatprep.subr.mxu0 0.0
        %389 = vmatpush1.msra.mxu0 %v373
        %390 = vmatprep.subr.mxu0 0.0
        %391 = vmatpush1.msra.mxu0 %v374
        %392 = vmatprep.subr.mxu0 0.0
        %393 = vmatpush1.msra.mxu0 %v375
        %394 = vmatprep.subr.mxu0 0.0
        %395 = vmatpush1.msra.mxu0 %v376
        %396 = vmatprep.subr.mxu0 0.0
        %397 = vmatpush1.msra.mxu0 0.0
        %398 = vmatprep.subr.mxu0 0.0
        %399 = vmatpush1.msra.mxu0 0.0
        %400 = vmatprep.subr.mxu0 0.0
        %401 = vmatpush1.msra.mxu0 0.0
        %402 = vmatprep.subr.mxu0 0.0
        %403 = vmatpush1.msra.mxu0 0.0
        %404 = vmatprep.subr.mxu0 0.0
        %405 = vmatpush1.msra.mxu0 0.0
        %406 = vmatprep.subr.mxu0 0.0
        %407 = vmatpush1.msra.mxu0 0.0
        %408 = vmatprep.subr.mxu0 0.0
        %409 = vmatpush1.msra.mxu0 0.0
        %410 = vmatprep.subr.mxu0 0.0
        %411 = vmatpush1.msra.mxu0 0.0
        %412 = vmatprep.subr.mxu0 0.0
        %413 = vmatpush1.msra.mxu0 0.0
        %414 = vmatprep.subr.mxu0 0.0
        %415 = vmatpush1.msra.mxu0 0.0
        %416 = vmatprep.subr.mxu0 0.0
        %417 = vmatpush1.msra.mxu0 0.0
        %418 = vmatprep.subr.mxu0 0.0
        %419 = vmatpush1.msra.mxu0 0.0
        %420 = vmatprep.subr.mxu0 0.0
        %421 = vmatpush1.msra.mxu0 0.0
        %422 = vmatprep.subr.mxu0 0.0
        %423 = vmatpush1.msra.mxu0 0.0
        %424 = vmatprep.subr.mxu0 0.0
        %425 = vmatpush1.msra.mxu0 0.0
        %426 = vmatprep.subr.mxu0 0.0
        %427 = vmatpush1.msra.mxu0 0.0
        %428 = vmatprep.subr.mxu0 0.0
        %429 = vmatpush1.msra.mxu0 0.0
        %430 = vmatprep.subr.mxu0 0.0
        %431 = vmatpush1.msra.mxu0 0.0
        %432 = vmatprep.subr.mxu0 0.0
        %433 = vmatpush1.msra.mxu0 0.0
        %434 = vmatprep.subr.mxu0 0.0
        %435 = vmatpush1.msra.mxu0 0.0
        %436 = vmatprep.subr.mxu0 0.0
        %437 = vmatpush1.msra.mxu0 0.0
        %438 = vmatprep.subr.mxu0 0.0
        %439 = vmatpush1.msra.mxu0 0.0
        %440 = vmatprep.subr.mxu0 0.0
        %441 = vmatpush1.msra.mxu0 0.0
        %442 = vmatprep.subr.mxu0 0.0
        %443 = vmatpush1.msra.mxu0 0.0
        %444 = vmatprep.subr.mxu0 0.0
        %445 = vmatpush1.msra.mxu0 0.0
        %446 = vmatprep.subr.mxu0 0.0
        %447 = vmatpush1.msra.mxu0 0.0
        %448 = vmatprep.subr.mxu0 0.0
        %449 = vmatpush1.msra.mxu0 0.0
        %450 = vmatprep.subr.mxu0 0.0
        %451 = vmatpush1.msra.mxu0 0.0
        %452 = vmatprep.mubr.f32.mxu0 0.0
        %453 = vmatmul.mubr.f32.gmra.mrb[0].mxu0 %v386
        %v454 = vpop.f32.mrb[0].mxu0
        %v455 = vadd.f32 %v382, %v454
        %v456 = vpop.f32.mrb[0].mxu0
        %457 = vdwg.mxu0
        %v458 = vxor.u32 %v455, 2147483648
        %v459 = vmul.f32 %v458, 1.442695
        %v460 = vpow.pop %v459
        %v461 = vadd.f32 %v460, 1.0
        %v462 = vrcp.pop %v461
        %v463 = vmul.f32 1.0, %v462
        %v464 = vmul.f32 %v455, %v463
        %v465 = vld [vmem:[%s3] sm:$0x3]
        %v466 = vld [vmem:[%s4] sm:$0x1]
        %v468 = vlaneseq
        %v469 = vshrl.u32 %v468, 7
        %v470 = vsub.s32 0, %v469
        %v471 = vrot.slane %v466, %v470
        %vm473 = vcmask 15360
        %v475 = vsel %vm473, %v464, 0
        %vm477 = vcmask 1041408
        %v479 = vsel %vm477, %v465, 0
        %481 = vmatprep.subr.mxu0 0.0
        %482 = vmatpush1.msra.mxu0 %v479
        %483 = vmatprep.subr.mxu0 0.0
        %484 = vmatpush1.msra.mxu0 0.0
        %485 = vmatprep.subr.mxu0 0.0
        %486 = vmatpush1.msra.mxu0 0.0
        %487 = vmatprep.subr.mxu0 0.0
        %488 = vmatpush1.msra.mxu0 0.0
        %489 = vmatprep.subr.mxu0 0.0
        %490 = vmatpush1.msra.mxu0 0.0
        %491 = vmatprep.subr.mxu0 0.0
        %492 = vmatpush1.msra.mxu0 0.0
        %493 = vmatprep.subr.mxu0 0.0
        %494 = vmatpush1.msra.mxu0 0.0
        %495 = vmatprep.subr.mxu0 0.0
        %496 = vmatpush1.msra.mxu0 0.0
        %497 = vmatprep.subr.mxu0 0.0
        %498 = vmatpush1.msra.mxu0 0.0
        %499 = vmatprep.subr.mxu0 0.0
        %500 = vmatpush1.msra.mxu0 0.0
        %501 = vmatprep.subr.mxu0 0.0
        %502 = vmatpush1.msra.mxu0 0.0
        %503 = vmatprep.subr.mxu0 0.0
        %504 = vmatpush1.msra.mxu0 0.0
        %505 = vmatprep.subr.mxu0 0.0
        %506 = vmatpush1.msra.mxu0 0.0
        %507 = vmatprep.subr.mxu0 0.0
        %508 = vmatpush1.msra.mxu0 0.0
        %509 = vmatprep.subr.mxu0 0.0
        %510 = vmatpush1.msra.mxu0 0.0
        %511 = vmatprep.subr.mxu0 0.0
        %512 = vmatpush1.msra.mxu0 0.0
        %513 = vmatprep.subr.mxu0 0.0
        %514 = vmatpush1.msra.mxu0 0.0
        %515 = vmatprep.subr.mxu0 0.0
        %516 = vmatpush1.msra.mxu0 0.0
        %517 = vmatprep.subr.mxu0 0.0
        %518 = vmatpush1.msra.mxu0 0.0
        %519 = vmatprep.subr.mxu0 0.0
        %520 = vmatpush1.msra.mxu0 0.0
        %521 = vmatprep.subr.mxu0 0.0
        %522 = vmatpush1.msra.mxu0 0.0
        %523 = vmatprep.subr.mxu0 0.0
        %524 = vmatpush1.msra.mxu0 0.0
        %525 = vmatprep.subr.mxu0 0.0
        %526 = vmatpush1.msra.mxu0 0.0
        %527 = vmatprep.subr.mxu0 0.0
        %528 = vmatpush1.msra.mxu0 0.0
        %529 = vmatprep.subr.mxu0 0.0
        %530 = vmatpush1.msra.mxu0 0.0
        %531 = vmatprep.subr.mxu0 0.0
        %532 = vmatpush1.msra.mxu0 0.0
        %533 = vmatprep.subr.mxu0 0.0
        %534 = vmatpush1.msra.mxu0 0.0
        %535 = vmatprep.subr.mxu0 0.0
        %536 = vmatpush1.msra.mxu0 0.0
        %537 = vmatprep.subr.mxu0 0.0
        %538 = vmatpush1.msra.mxu0 0.0
        %539 = vmatprep.subr.mxu0 0.0
        %540 = vmatpush1.msra.mxu0 0.0
        %541 = vmatprep.subr.mxu0 0.0
        %542 = vmatpush1.msra.mxu0 0.0
        %543 = vmatprep.subr.mxu0 0.0
        %544 = vmatpush1.msra.mxu0 0.0
        %545 = vmatprep.mubr.f32.mxu0 0.0
        %546 = vmatmul.mubr.f32.gmra.mrb[0].mxu0 %v475
        %v547 = vpop.f32.mrb[0].mxu0
        %v548 = vadd.f32 %v471, %v547
        %v549 = vpop.f32.mrb[0].mxu0
        %550 = vdwg.mxu0
        %v552 = vrot.slane %v548, 1
        %v554 = vadd.f32 %v548, %v552
        %v555 = vxor.u32 %v554, 2147483648
        %v556 = vmul.f32 %v555, 1.442695
        %v557 = vpow.pop %v556
        %v558 = vadd.f32 %v557, 1.0
        %v559 = vrcp.pop %v558
        %v560 = vmul.f32 1.0, %v559
        %v561 = vlaneseq
        %v562 = vshrl.u32 %v561, 7
        %v563 = vsub.s32 0, %v562
        %v564 = vrot.slane %v560, %v563
        %566 = vbcast.lane.b32.xlu0 %v564, 256
        %v567 = vpop.permute.xlu0 %566
        %s569 = sor.u32 256, 8
        %570 = vbcast.lane.b32.xlu0 %v564, %s569
        %v571 = vpop.permute.xlu0 %570
        %s573 = sor.u32 256, 16
        %574 = vbcast.lane.b32.xlu0 %v564, %s573
        %v575 = vpop.permute.xlu0 %574
        %s577 = sor.u32 256, 24
        %578 = vbcast.lane.b32.xlu0 %v564, %s577
        %v579 = vpop.permute.xlu0 %578
        %v580 = vmul.f32 %v278, %v567
        %v581 = vmul.f32 %v279, %v567
        %v582 = vmul.f32 %v280, %v571
        %v583 = vmul.f32 %v281, %v571
        %v584 = vmul.f32 %v282, %v575
        %v585 = vmul.f32 %v283, %v575
        %v586 = vmul.f32 %v284, %v579
        %v587 = vmul.f32 %v285, %v579
        %v588 = vmax.f32 %v580, %v584
        %v589 = vmax.f32 %v582, %v586
        %v590 = vmax.f32 %v588, %v589
        %v591 = vrot.slane %v590, 4
        %v592 = vmax.f32 %v590, %v591
        %v593 = vrot.slane %v592, 2
        %v594 = vmax.f32 %v592, %v593
        %v595 = vrot.slane %v594, 1
        %v596 = vmax.f32 %v594, %v595
        %v597 = vmax.f32 %v581, %v585
        %v598 = vmax.f32 %v583, %v587
        %v599 = vmax.f32 %v597, %v598
        %v600 = vrot.slane %v599, 4
        %v601 = vmax.f32 %v599, %v600
        %v602 = vrot.slane %v601, 2
        %v603 = vmax.f32 %v601, %v602
        %v604 = vrot.slane %v603, 1
        %v605 = vmax.f32 %v603, %v604
        %v606 = vadd.f32 %v580, %v582
        %v607 = vadd.f32 %v606, %v584
        %v608 = vadd.f32 %v607, %v586
        %v609 = vrot.slane %v608, 4
        %v610 = vadd.f32 %v608, %v609
        %v611 = vrot.slane %v610, 2
        %v612 = vadd.f32 %v610, %v611
        %v613 = vrot.slane %v612, 1
        %v614 = vadd.f32 %v612, %v613
        %v615 = vadd.f32 %v581, %v583
        %v616 = vadd.f32 %v615, %v585
        %v617 = vadd.f32 %v616, %v587
        %v618 = vrot.slane %v617, 4
        %v619 = vadd.f32 %v617, %v618
        %v620 = vrot.slane %v619, 2
        %v621 = vadd.f32 %v619, %v620
        %v622 = vrot.slane %v621, 1
        %v623 = vadd.f32 %v621, %v622
        %v624 = vrcp.pop 32.0
        %v625 = vmul.f32 %v614, %v624
        %v626 = vmul.f32 %v623, %v624
        %628 = vrot.lane.b32.xlu0 %v596, 112
        %v629 = vpop.permute.xlu0 %628
        %631 = vrot.lane.b32.xlu0 %v596, 96
        %v632 = vpop.permute.xlu0 %631
        %634 = vrot.lane.b32.xlu0 %v596, 80
        %v635 = vpop.permute.xlu0 %634
        %637 = vrot.lane.b32.xlu0 %v596, 64
        %v638 = vpop.permute.xlu0 %637
        %640 = vrot.lane.b32.xlu0 %v596, 48
        %v641 = vpop.permute.xlu0 %640
        %643 = vrot.lane.b32.xlu0 %v596, 32
        %v644 = vpop.permute.xlu0 %643
        %646 = vrot.lane.b32.xlu0 %v596, 16
        %v647 = vpop.permute.xlu0 %646
        %650 = vrot.lane.b32.xlu0 %v605, 112
        %v651 = vpop.permute.xlu0 %650
        %653 = vrot.lane.b32.xlu0 %v605, 96
        %v654 = vpop.permute.xlu0 %653
        %656 = vrot.lane.b32.xlu0 %v605, 80
        %v657 = vpop.permute.xlu0 %656
        %659 = vrot.lane.b32.xlu0 %v605, 64
        %v660 = vpop.permute.xlu0 %659
        %662 = vrot.lane.b32.xlu0 %v605, 48
        %v663 = vpop.permute.xlu0 %662
        %665 = vrot.lane.b32.xlu0 %v605, 32
        %v666 = vpop.permute.xlu0 %665
        %668 = vrot.lane.b32.xlu0 %v605, 16
        %v669 = vpop.permute.xlu0 %668
        %v671 = vsel %vm371, %v596, %v629
        %v672 = vsel %vm477, %v671, %v632
        %vm673 = vcmask 1042432
        %v674 = vsel %vm673, %v672, %v635
        %vm675 = vcmask 1043456
        %v676 = vsel %vm675, %v674, %v638
        %vm677 = vcmask 1044480
        %v678 = vsel %vm677, %v676, %v641
        %vm679 = vcmask 1045504
        %v680 = vsel %vm679, %v678, %v644
        %vm681 = vcmask 1046528
        %v682 = vsel %vm681, %v680, %v647
        %v683 = vsel %vm371, %v605, %v651
        %v684 = vsel %vm477, %v683, %v654
        %v685 = vsel %vm673, %v684, %v657
        %v686 = vsel %vm675, %v685, %v660
        %v687 = vsel %vm677, %v686, %v663
        %v688 = vsel %vm679, %v687, %v666
        %v689 = vsel %vm681, %v688, %v669
        %v692 = vrot.slane %v682, 5
        %v693 = vrot.slane %v689, 5
        %v694 = vsel %vm673, %v692, %v693
        %v697 = vsel %vm673, 0.0, %v692
        %v698 = vsel %vm673, %v693, 0.0
        %701 = vrot.lane.b32.xlu0 %v697, 3
        %v702 = vpop.permute.xlu0 %701
        %703 = vrot.lane.b32.xlu0 %v694, 3
        %v704 = vpop.permute.xlu0 %703
        %705 = vrot.lane.b32.xlu0 %v698, 3
        %v706 = vpop.permute.xlu0 %705
        %vm710 = vcmask 23552
        %v711 = vsel %vm710, 0.0, %v702
        %v712 = vsel %vm710, 0.0, %v704
        %v713 = vsel %vm710, 0.0, %v706
        %vm714 = vcmask 154624
        %v715 = vsel %vm714, %v711, 0.0
        %v716 = vsel %vm714, %v712, 0.0
        %v717 = vsel %vm714, %v713, 0.0
        %719 = vrot.lane.b32.xlu0 %v625, 112
        %v720 = vpop.permute.xlu0 %719
        %722 = vrot.lane.b32.xlu0 %v625, 96
        %v723 = vpop.permute.xlu0 %722
        %725 = vrot.lane.b32.xlu0 %v625, 80
        %v726 = vpop.permute.xlu0 %725
        %728 = vrot.lane.b32.xlu0 %v625, 64
        %v729 = vpop.permute.xlu0 %728
        %731 = vrot.lane.b32.xlu0 %v625, 48
        %v732 = vpop.permute.xlu0 %731
        %734 = vrot.lane.b32.xlu0 %v625, 32
        %v735 = vpop.permute.xlu0 %734
        %737 = vrot.lane.b32.xlu0 %v625, 16
        %v738 = vpop.permute.xlu0 %737
        %741 = vrot.lane.b32.xlu0 %v626, 112
        %v742 = vpop.permute.xlu0 %741
        %744 = vrot.lane.b32.xlu0 %v626, 96
        %v745 = vpop.permute.xlu0 %744
        %747 = vrot.lane.b32.xlu0 %v626, 80
        %v748 = vpop.permute.xlu0 %747
        %750 = vrot.lane.b32.xlu0 %v626, 64
        %v751 = vpop.permute.xlu0 %750
        %753 = vrot.lane.b32.xlu0 %v626, 48
        %v754 = vpop.permute.xlu0 %753
        %756 = vrot.lane.b32.xlu0 %v626, 32
        %v757 = vpop.permute.xlu0 %756
        %759 = vrot.lane.b32.xlu0 %v626, 16
        %v760 = vpop.permute.xlu0 %759
        %v762 = vsel %vm371, %v625, %v720
        %v763 = vsel %vm477, %v762, %v723
        %v764 = vsel %vm673, %v763, %v726
        %v765 = vsel %vm675, %v764, %v729
        %v766 = vsel %vm677, %v765, %v732
        %v767 = vsel %vm679, %v766, %v735
        %v768 = vsel %vm681, %v767, %v738
        %v769 = vsel %vm371, %v626, %v742
        %v770 = vsel %vm477, %v769, %v745
        %v771 = vsel %vm673, %v770, %v748
        %v772 = vsel %vm675, %v771, %v751
        %v773 = vsel %vm677, %v772, %v754
        %v774 = vsel %vm679, %v773, %v757
        %v775 = vsel %vm681, %v774, %v760
        %v778 = vrot.slane %v768, 5
        %v779 = vrot.slane %v775, 5
        %v780 = vsel %vm673, %v778, %v779
        %v783 = vsel %vm673, 0.0, %v778
        %v784 = vsel %vm673, %v779, 0.0
        %787 = vrot.lane.b32.xlu0 %v783, 3
        %v788 = vpop.permute.xlu0 %787
        %789 = vrot.lane.b32.xlu0 %v780, 3
        %v790 = vpop.permute.xlu0 %789
        %791 = vrot.lane.b32.xlu0 %v784, 3
        %v792 = vpop.permute.xlu0 %791
        %v796 = vsel %vm710, 0.0, %v788
        %v797 = vsel %vm710, 0.0, %v790
        %v798 = vsel %vm710, 0.0, %v792
        %v799 = vsel %vm714, %v796, 0.0
        %v800 = vsel %vm714, %v797, 0.0
        %v801 = vsel %vm714, %v798, 0.0
        %v802 = vld [vmem:[%s5] sm:$0xff]
        %v803 = vld [vmem:[%s5 + $0x8] sm:$0xff]
        %v804 = vld [vmem:[%s5 + $0x10] sm:$0x3f]
        %s805 = scalar_lea.vmem %s5, 168
        %v806 = vld [vmem:[%s805] sm:$0xff]
        %v807 = vld [vmem:[%s805 + $0x8] sm:$0xff]
        %v808 = vld [vmem:[%s805 + $0x10] sm:$0x3f]
        %vm809 = vcmask 179200
        %v811 = vsel %vm809, %v799, 0
        %v814 = vsel %vm809, %v800, 0
        %v817 = vsel %vm679, %v808, 0
        %819 = vmatprep.subr.mxu0 0.0
        %820 = vmatpush1.msra.mxu0 %v806
        %821 = vmatprep.subr.mxu0 0.0
        %822 = vmatpush1.msra.mxu0 %v807
        %823 = vmatprep.subr.mxu0 0.0
        %824 = vmatpush1.msra.mxu0 %v817
        %825 = vmatprep.subr.mxu0 0.0
        %826 = vmatpush1.msra.mxu0 0.0
        %827 = vmatprep.subr.mxu0 0.0
        %828 = vmatpush1.msra.mxu0 0.0
        %829 = vmatprep.subr.mxu0 0.0
        %830 = vmatpush1.msra.mxu0 0.0
        %831 = vmatprep.subr.mxu0 0.0
        %832 = vmatpush1.msra.mxu0 0.0
        %833 = vmatprep.subr.mxu0 0.0
        %834 = vmatpush1.msra.mxu0 0.0
        %835 = vmatprep.subr.mxu0 0.0
        %836 = vmatpush1.msra.mxu0 0.0
        %837 = vmatprep.subr.mxu0 0.0
        %838 = vmatpush1.msra.mxu0 0.0
        %839 = vmatprep.subr.mxu0 0.0
        %840 = vmatpush1.msra.mxu0 0.0
        %841 = vmatprep.subr.mxu0 0.0
        %842 = vmatpush1.msra.mxu0 0.0
        %843 = vmatprep.subr.mxu0 0.0
        %844 = vmatpush1.msra.mxu0 0.0
        %845 = vmatprep.subr.mxu0 0.0
        %846 = vmatpush1.msra.mxu0 0.0
        %847 = vmatprep.subr.mxu0 0.0
        %848 = vmatpush1.msra.mxu0 0.0
        %849 = vmatprep.subr.mxu0 0.0
        %850 = vmatpush1.msra.mxu0 0.0
        %851 = vmatprep.subr.mxu0 0.0
        %852 = vmatpush1.msra.mxu0 0.0
        %853 = vmatprep.subr.mxu0 0.0
        %854 = vmatpush1.msra.mxu0 0.0
        %855 = vmatprep.subr.mxu0 0.0
        %856 = vmatpush1.msra.mxu0 0.0
        %857 = vmatprep.subr.mxu0 0.0
        %858 = vmatpush1.msra.mxu0 0.0
        %859 = vmatprep.subr.mxu0 0.0
        %860 = vmatpush1.msra.mxu0 0.0
        %861 = vmatprep.subr.mxu0 0.0
        %862 = vmatpush1.msra.mxu0 0.0
        %863 = vmatprep.subr.mxu0 0.0
        %864 = vmatpush1.msra.mxu0 0.0
        %865 = vmatprep.subr.mxu0 0.0
        %866 = vmatpush1.msra.mxu0 0.0
        %867 = vmatprep.subr.mxu0 0.0
        %868 = vmatpush1.msra.mxu0 0.0
        %869 = vmatprep.subr.mxu0 0.0
        %870 = vmatpush1.msra.mxu0 0.0
        %871 = vmatprep.subr.mxu0 0.0
        %872 = vmatpush1.msra.mxu0 0.0
        %873 = vmatprep.subr.mxu0 0.0
        %874 = vmatpush1.msra.mxu0 0.0
        %875 = vmatprep.subr.mxu0 0.0
        %876 = vmatpush1.msra.mxu0 0.0
        %877 = vmatprep.subr.mxu0 0.0
        %878 = vmatpush1.msra.mxu0 0.0
        %879 = vmatprep.subr.mxu0 0.0
        %880 = vmatpush1.msra.mxu0 0.0
        %881 = vmatprep.subr.mxu0 0.0
        %882 = vmatpush1.msra.mxu0 0.0
        %883 = vmatprep.mubr.f32.mxu0 0.0
        %884 = vmatmul.mubr.f32.gmra.mrb[0].mxu0 %v811
        %v885 = vpop.f32.mrb[0].mxu0
        %v886 = vadd.f32 0.0, %v885
        %v887 = vpop.f32.mrb[0].mxu0
        %888 = vmatprep.mubr.f32.mxu0 0.0
        %889 = vmatmul.mubr.f32.gmra.mrb[0].mxu0 %v814
        %v890 = vpop.f32.mrb[0].mxu0
        %v891 = vadd.f32 0.0, %v890
        %v892 = vpop.f32.mrb[0].mxu0
        %893 = vdwg.mxu0
        %v895 = vsel %vm809, %v715, 0
        %v898 = vsel %vm809, %v716, 0
        %v901 = vsel %vm679, %v804, 0
        %903 = vmatprep.subr.mxu0 0.0
        %904 = vmatpush1.msra.mxu0 %v802
        %905 = vmatprep.subr.mxu0 0.0
        %906 = vmatpush1.msra.mxu0 %v803
        %907 = vmatprep.subr.mxu0 0.0
        %908 = vmatpush1.msra.mxu0 %v901
        %909 = vmatprep.subr.mxu0 0.0
        %910 = vmatpush1.msra.mxu0 0.0
        %911 = vmatprep.subr.mxu0 0.0
        %912 = vmatpush1.msra.mxu0 0.0
        %913 = vmatprep.subr.mxu0 0.0
        %914 = vmatpush1.msra.mxu0 0.0
        %915 = vmatprep.subr.mxu0 0.0
        %916 = vmatpush1.msra.mxu0 0.0
        %917 = vmatprep.subr.mxu0 0.0
        %918 = vmatpush1.msra.mxu0 0.0
        %919 = vmatprep.subr.mxu0 0.0
        %920 = vmatpush1.msra.mxu0 0.0
        %921 = vmatprep.subr.mxu0 0.0
        %922 = vmatpush1.msra.mxu0 0.0
        %923 = vmatprep.subr.mxu0 0.0
        %924 = vmatpush1.msra.mxu0 0.0
        %925 = vmatprep.subr.mxu0 0.0
        %926 = vmatpush1.msra.mxu0 0.0
        %927 = vmatprep.subr.mxu0 0.0
        %928 = vmatpush1.msra.mxu0 0.0
        %929 = vmatprep.subr.mxu0 0.0
        %930 = vmatpush1.msra.mxu0 0.0
        %931 = vmatprep.subr.mxu0 0.0
        %932 = vmatpush1.msra.mxu0 0.0
        %933 = vmatprep.subr.mxu0 0.0
        %934 = vmatpush1.msra.mxu0 0.0
        %935 = vmatprep.subr.mxu0 0.0
        %936 = vmatpush1.msra.mxu0 0.0
        %937 = vmatprep.subr.mxu0 0.0
        %938 = vmatpush1.msra.mxu0 0.0
        %939 = vmatprep.subr.mxu0 0.0
        %940 = vmatpush1.msra.mxu0 0.0
        %941 = vmatprep.subr.mxu0 0.0
        %942 = vmatpush1.msra.mxu0 0.0
        %943 = vmatprep.subr.mxu0 0.0
        %944 = vmatpush1.msra.mxu0 0.0
        %945 = vmatprep.subr.mxu0 0.0
        %946 = vmatpush1.msra.mxu0 0.0
        %947 = vmatprep.subr.mxu0 0.0
        %948 = vmatpush1.msra.mxu0 0.0
        %949 = vmatprep.subr.mxu0 0.0
        %950 = vmatpush1.msra.mxu0 0.0
        %951 = vmatprep.subr.mxu0 0.0
        %952 = vmatpush1.msra.mxu0 0.0
        %953 = vmatprep.subr.mxu0 0.0
        %954 = vmatpush1.msra.mxu0 0.0
        %955 = vmatprep.subr.mxu0 0.0
        %956 = vmatpush1.msra.mxu0 0.0
        %957 = vmatprep.subr.mxu0 0.0
        %958 = vmatpush1.msra.mxu0 0.0
        %959 = vmatprep.subr.mxu0 0.0
        %960 = vmatpush1.msra.mxu0 0.0
        %961 = vmatprep.subr.mxu0 0.0
        %962 = vmatpush1.msra.mxu0 0.0
        %963 = vmatprep.subr.mxu0 0.0
        %964 = vmatpush1.msra.mxu0 0.0
        %965 = vmatprep.subr.mxu0 0.0
        %966 = vmatpush1.msra.mxu0 0.0
        %967 = vmatprep.mubr.f32.mxu0 0.0
        %968 = vmatmul.mubr.f32.gmra.mrb[0].mxu0 %v895
        %v969 = vpop.f32.mrb[0].mxu0
        %v970 = vadd.f32 %v886, %v969
        %v971 = vpop.f32.mrb[0].mxu0
        %972 = vmatprep.mubr.f32.mxu0 0.0
        %973 = vmatmul.mubr.f32.gmra.mrb[0].mxu0 %v898
        %v974 = vpop.f32.mrb[0].mxu0
        %v975 = vadd.f32 %v891, %v974
        %v976 = vpop.f32.mrb[0].mxu0
        %977 = vdwg.mxu0
        %s978 = scalar_lea.vmem %s5, 24
        %v979 = vld [vmem:[%s978] sm:$0xff]
        %v980 = vld [vmem:[%s978 + $0x8] sm:$0xff]
        %v981 = vld [vmem:[%s978 + $0x10] sm:$0x3f]
        %v983 = vrot.slane %v715, 1
        %v984 = vrot.slane %v716, 1
        %v985 = vsel %vm681, %v983, %v984
        %v986 = vrot.slane %v717, 1
        %v987 = vsel %vm681, %v984, %v986
        %v988 = vsel %vm809, %v985, 0
        %v990 = vsel %vm809, %v987, 0
        %v993 = vsel %vm679, %v981, 0
        %995 = vmatprep.subr.mxu0 0.0
        %996 = vmatpush1.msra.mxu0 %v979
        %997 = vmatprep.subr.mxu0 0.0
        %998 = vmatpush1.msra.mxu0 %v980
        %999 = vmatprep.subr.mxu0 0.0
        %1000 = vmatpush1.msra.mxu0 %v993
        %1001 = vmatprep.subr.mxu0 0.0
        %1002 = vmatpush1.msra.mxu0 0.0
        %1003 = vmatprep.subr.mxu0 0.0
        %1004 = vmatpush1.msra.mxu0 0.0
        %1005 = vmatprep.subr.mxu0 0.0
        %1006 = vmatpush1.msra.mxu0 0.0
        %1007 = vmatprep.subr.mxu0 0.0
        %1008 = vmatpush1.msra.mxu0 0.0
        %1009 = vmatprep.subr.mxu0 0.0
        %1010 = vmatpush1.msra.mxu0 0.0
        %1011 = vmatprep.subr.mxu0 0.0
        %1012 = vmatpush1.msra.mxu0 0.0
        %1013 = vmatprep.subr.mxu0 0.0
        %1014 = vmatpush1.msra.mxu0 0.0
        %1015 = vmatprep.subr.mxu0 0.0
        %1016 = vmatpush1.msra.mxu0 0.0
        %1017 = vmatprep.subr.mxu0 0.0
        %1018 = vmatpush1.msra.mxu0 0.0
        %1019 = vmatprep.subr.mxu0 0.0
        %1020 = vmatpush1.msra.mxu0 0.0
        %1021 = vmatprep.subr.mxu0 0.0
        %1022 = vmatpush1.msra.mxu0 0.0
        %1023 = vmatprep.subr.mxu0 0.0
        %1024 = vmatpush1.msra.mxu0 0.0
        %1025 = vmatprep.subr.mxu0 0.0
        %1026 = vmatpush1.msra.mxu0 0.0
        %1027 = vmatprep.subr.mxu0 0.0
        %1028 = vmatpush1.msra.mxu0 0.0
        %1029 = vmatprep.subr.mxu0 0.0
        %1030 = vmatpush1.msra.mxu0 0.0
        %1031 = vmatprep.subr.mxu0 0.0
        %1032 = vmatpush1.msra.mxu0 0.0
        %1033 = vmatprep.subr.mxu0 0.0
        %1034 = vmatpush1.msra.mxu0 0.0
        %1035 = vmatprep.subr.mxu0 0.0
        %1036 = vmatpush1.msra.mxu0 0.0
        %1037 = vmatprep.subr.mxu0 0.0
        %1038 = vmatpush1.msra.mxu0 0.0
        %1039 = vmatprep.subr.mxu0 0.0
        %1040 = vmatpush1.msra.mxu0 0.0
        %1041 = vmatprep.subr.mxu0 0.0
        %1042 = vmatpush1.msra.mxu0 0.0
        %1043 = vmatprep.subr.mxu0 0.0
        %1044 = vmatpush1.msra.mxu0 0.0
        %1045 = vmatprep.subr.mxu0 0.0
        %1046 = vmatpush1.msra.mxu0 0.0
        %1047 = vmatprep.subr.mxu0 0.0
        %1048 = vmatpush1.msra.mxu0 0.0
        %1049 = vmatprep.subr.mxu0 0.0
        %1050 = vmatpush1.msra.mxu0 0.0
        %1051 = vmatprep.subr.mxu0 0.0
        %1052 = vmatpush1.msra.mxu0 0.0
        %1053 = vmatprep.subr.mxu0 0.0
        %1054 = vmatpush1.msra.mxu0 0.0
        %1055 = vmatprep.subr.mxu0 0.0
        %1056 = vmatpush1.msra.mxu0 0.0
        %1057 = vmatprep.subr.mxu0 0.0
        %1058 = vmatpush1.msra.mxu0 0.0
        %1059 = vmatprep.mubr.f32.mxu0 0.0
        %1060 = vmatmul.mubr.f32.gmra.mrb[0].mxu0 %v988
        %v1061 = vpop.f32.mrb[0].mxu0
        %v1062 = vadd.f32 0.0, %v1061
        %v1063 = vpop.f32.mrb[0].mxu0
        %1064 = vmatprep.mubr.f32.mxu0 0.0
        %1065 = vmatmul.mubr.f32.gmra.mrb[0].mxu0 %v990
        %v1066 = vpop.f32.mrb[0].mxu0
        %v1067 = vadd.f32 0.0, %v1066
        %v1068 = vpop.f32.mrb[0].mxu0
        %1069 = vdwg.mxu0
        %v1070 = vadd.f32 %v970, %v1062
        %v1071 = vadd.f32 %v975, %v1067
        %s1072 = scalar_lea.vmem %s5, 192
        %v1073 = vld [vmem:[%s1072] sm:$0xff]
        %v1074 = vld [vmem:[%s1072 + $0x8] sm:$0xff]
        %v1075 = vld [vmem:[%s1072 + $0x10] sm:$0x3f]
        %v1077 = vrot.slane %v799, 1
        %v1078 = vrot.slane %v800, 1
        %v1079 = vsel %vm681, %v1077, %v1078
        %v1080 = vrot.slane %v801, 1
        %v1081 = vsel %vm681, %v1078, %v1080
        %v1082 = vsel %vm809, %v1079, 0
        %v1084 = vsel %vm809, %v1081, 0
        %v1087 = vsel %vm679, %v1075, 0
        %1089 = vmatprep.subr.mxu0 0.0
        %1090 = vmatpush1.msra.mxu0 %v1073
        %1091 = vmatprep.subr.mxu0 0.0
        %1092 = vmatpush1.msra.mxu0 %v1074
        %1093 = vmatprep.subr.mxu0 0.0
        %1094 = vmatpush1.msra.mxu0 %v1087
        %1095 = vmatprep.subr.mxu0 0.0
        %1096 = vmatpush1.msra.mxu0 0.0
        %1097 = vmatprep.subr.mxu0 0.0
        %1098 = vmatpush1.msra.mxu0 0.0
        %1099 = vmatprep.subr.mxu0 0.0
        %1100 = vmatpush1.msra.mxu0 0.0
        %1101 = vmatprep.subr.mxu0 0.0
        %1102 = vmatpush1.msra.mxu0 0.0
        %1103 = vmatprep.subr.mxu0 0.0
        %1104 = vmatpush1.msra.mxu0 0.0
        %1105 = vmatprep.subr.mxu0 0.0
        %1106 = vmatpush1.msra.mxu0 0.0
        %1107 = vmatprep.subr.mxu0 0.0
        %1108 = vmatpush1.msra.mxu0 0.0
        %1109 = vmatprep.subr.mxu0 0.0
        %1110 = vmatpush1.msra.mxu0 0.0
        %1111 = vmatprep.subr.mxu0 0.0
        %1112 = vmatpush1.msra.mxu0 0.0
        %1113 = vmatprep.subr.mxu0 0.0
        %1114 = vmatpush1.msra.mxu0 0.0
        %1115 = vmatprep.subr.mxu0 0.0
        %1116 = vmatpush1.msra.mxu0 0.0
        %1117 = vmatprep.subr.mxu0 0.0
        %1118 = vmatpush1.msra.mxu0 0.0
        %1119 = vmatprep.subr.mxu0 0.0
        %1120 = vmatpush1.msra.mxu0 0.0
        %1121 = vmatprep.subr.mxu0 0.0
        %1122 = vmatpush1.msra.mxu0 0.0
        %1123 = vmatprep.subr.mxu0 0.0
        %1124 = vmatpush1.msra.mxu0 0.0
        %1125 = vmatprep.subr.mxu0 0.0
        %1126 = vmatpush1.msra.mxu0 0.0
        %1127 = vmatprep.subr.mxu0 0.0
        %1128 = vmatpush1.msra.mxu0 0.0
        %1129 = vmatprep.subr.mxu0 0.0
        %1130 = vmatpush1.msra.mxu0 0.0
        %1131 = vmatprep.subr.mxu0 0.0
        %1132 = vmatpush1.msra.mxu0 0.0
        %1133 = vmatprep.subr.mxu0 0.0
        %1134 = vmatpush1.msra.mxu0 0.0
        %1135 = vmatprep.subr.mxu0 0.0
        %1136 = vmatpush1.msra.mxu0 0.0
        %1137 = vmatprep.subr.mxu0 0.0
        %1138 = vmatpush1.msra.mxu0 0.0
        %1139 = vmatprep.subr.mxu0 0.0
        %1140 = vmatpush1.msra.mxu0 0.0
        %1141 = vmatprep.subr.mxu0 0.0
        %1142 = vmatpush1.msra.mxu0 0.0
        %1143 = vmatprep.subr.mxu0 0.0
        %1144 = vmatpush1.msra.mxu0 0.0
        %1145 = vmatprep.subr.mxu0 0.0
        %1146 = vmatpush1.msra.mxu0 0.0
        %1147 = vmatprep.subr.mxu0 0.0
        %1148 = vmatpush1.msra.mxu0 0.0
        %1149 = vmatprep.subr.mxu0 0.0
        %1150 = vmatpush1.msra.mxu0 0.0
        %1151 = vmatprep.subr.mxu0 0.0
        %1152 = vmatpush1.msra.mxu0 0.0
        %1153 = vmatprep.mubr.f32.mxu0 0.0
        %1154 = vmatmul.mubr.f32.gmra.mrb[0].mxu0 %v1082
        %v1155 = vpop.f32.mrb[0].mxu0
        %v1156 = vadd.f32 0.0, %v1155
        %v1157 = vpop.f32.mrb[0].mxu0
        %1158 = vmatprep.mubr.f32.mxu0 0.0
        %1159 = vmatmul.mubr.f32.gmra.mrb[0].mxu0 %v1084
        %v1160 = vpop.f32.mrb[0].mxu0
        %v1161 = vadd.f32 0.0, %v1160
        %v1162 = vpop.f32.mrb[0].mxu0
        %1163 = vdwg.mxu0
        %v1164 = vadd.f32 %v1070, %v1156
        %v1165 = vadd.f32 %v1071, %v1161
        %s1166 = scalar_lea.vmem %s5, 48
        %v1167 = vld [vmem:[%s1166] sm:$0xff]
        %v1168 = vld [vmem:[%s1166 + $0x8] sm:$0xff]
        %v1169 = vld [vmem:[%s1166 + $0x10] sm:$0x3f]
        %v1170 = vrot.slane %v715, 2
        %v1171 = vrot.slane %v716, 2
        %v1172 = vsel %vm679, %v1170, %v1171
        %v1173 = vrot.slane %v717, 2
        %v1174 = vsel %vm679, %v1171, %v1173
        %v1175 = vsel %vm809, %v1172, 0
        %v1177 = vsel %vm809, %v1174, 0
        %v1180 = vsel %vm679, %v1169, 0
        %1182 = vmatprep.subr.mxu0 0.0
        %1183 = vmatpush1.msra.mxu0 %v1167
        %1184 = vmatprep.subr.mxu0 0.0
        %1185 = vmatpush1.msra.mxu0 %v1168
        %1186 = vmatprep.subr.mxu0 0.0
        %1187 = vmatpush1.msra.mxu0 %v1180
        %1188 = vmatprep.subr.mxu0 0.0
        %1189 = vmatpush1.msra.mxu0 0.0
        %1190 = vmatprep.subr.mxu0 0.0
        %1191 = vmatpush1.msra.mxu0 0.0
        %1192 = vmatprep.subr.mxu0 0.0
        %1193 = vmatpush1.msra.mxu0 0.0
        %1194 = vmatprep.subr.mxu0 0.0
        %1195 = vmatpush1.msra.mxu0 0.0
        %1196 = vmatprep.subr.mxu0 0.0
        %1197 = vmatpush1.msra.mxu0 0.0
        %1198 = vmatprep.subr.mxu0 0.0
        %1199 = vmatpush1.msra.mxu0 0.0
        %1200 = vmatprep.subr.mxu0 0.0
        %1201 = vmatpush1.msra.mxu0 0.0
        %1202 = vmatprep.subr.mxu0 0.0
        %1203 = vmatpush1.msra.mxu0 0.0
        %1204 = vmatprep.subr.mxu0 0.0
        %1205 = vmatpush1.msra.mxu0 0.0
        %1206 = vmatprep.subr.mxu0 0.0
        %1207 = vmatpush1.msra.mxu0 0.0
        %1208 = vmatprep.subr.mxu0 0.0
        %1209 = vmatpush1.msra.mxu0 0.0
        %1210 = vmatprep.subr.mxu0 0.0
        %1211 = vmatpush1.msra.mxu0 0.0
        %1212 = vmatprep.subr.mxu0 0.0
        %1213 = vmatpush1.msra.mxu0 0.0
        %1214 = vmatprep.subr.mxu0 0.0
        %1215 = vmatpush1.msra.mxu0 0.0
        %1216 = vmatprep.subr.mxu0 0.0
        %1217 = vmatpush1.msra.mxu0 0.0
        %1218 = vmatprep.subr.mxu0 0.0
        %1219 = vmatpush1.msra.mxu0 0.0
        %1220 = vmatprep.subr.mxu0 0.0
        %1221 = vmatpush1.msra.mxu0 0.0
        %1222 = vmatprep.subr.mxu0 0.0
        %1223 = vmatpush1.msra.mxu0 0.0
        %1224 = vmatprep.subr.mxu0 0.0
        %1225 = vmatpush1.msra.mxu0 0.0
        %1226 = vmatprep.subr.mxu0 0.0
        %1227 = vmatpush1.msra.mxu0 0.0
        %1228 = vmatprep.subr.mxu0 0.0
        %1229 = vmatpush1.msra.mxu0 0.0
        %1230 = vmatprep.subr.mxu0 0.0
        %1231 = vmatpush1.msra.mxu0 0.0
        %1232 = vmatprep.subr.mxu0 0.0
        %1233 = vmatpush1.msra.mxu0 0.0
        %1234 = vmatprep.subr.mxu0 0.0
        %1235 = vmatpush1.msra.mxu0 0.0
        %1236 = vmatprep.subr.mxu0 0.0
        %1237 = vmatpush1.msra.mxu0 0.0
        %1238 = vmatprep.subr.mxu0 0.0
        %1239 = vmatpush1.msra.mxu0 0.0
        %1240 = vmatprep.subr.mxu0 0.0
        %1241 = vmatpush1.msra.mxu0 0.0
        %1242 = vmatprep.subr.mxu0 0.0
        %1243 = vmatpush1.msra.mxu0 0.0
        %1244 = vmatprep.subr.mxu0 0.0
        %1245 = vmatpush1.msra.mxu0 0.0
        %1246 = vmatprep.mubr.f32.mxu0 0.0
        %1247 = vmatmul.mubr.f32.gmra.mrb[0].mxu0 %v1175
        %v1248 = vpop.f32.mrb[0].mxu0
        %v1249 = vadd.f32 0.0, %v1248
        %v1250 = vpop.f32.mrb[0].mxu0
        %1251 = vmatprep.mubr.f32.mxu0 0.0
        %1252 = vmatmul.mubr.f32.gmra.mrb[0].mxu0 %v1177
        %v1253 = vpop.f32.mrb[0].mxu0
        %v1254 = vadd.f32 0.0, %v1253
        %v1255 = vpop.f32.mrb[0].mxu0
        %1256 = vdwg.mxu0
        %v1257 = vadd.f32 %v1164, %v1249
        %v1258 = vadd.f32 %v1165, %v1254
        %s1259 = scalar_lea.vmem %s5, 216
        %v1260 = vld [vmem:[%s1259] sm:$0xff]
        %v1261 = vld [vmem:[%s1259 + $0x8] sm:$0xff]
        %v1262 = vld [vmem:[%s1259 + $0x10] sm:$0x3f]
        %v1263 = vrot.slane %v799, 2
        %v1264 = vrot.slane %v800, 2
        %v1265 = vsel %vm679, %v1263, %v1264
        %v1266 = vrot.slane %v801, 2
        %v1267 = vsel %vm679, %v1264, %v1266
        %v1268 = vsel %vm809, %v1265, 0
        %v1270 = vsel %vm809, %v1267, 0
        %v1273 = vsel %vm679, %v1262, 0
        %1275 = vmatprep.subr.mxu0 0.0
        %1276 = vmatpush1.msra.mxu0 %v1260
        %1277 = vmatprep.subr.mxu0 0.0
        %1278 = vmatpush1.msra.mxu0 %v1261
        %1279 = vmatprep.subr.mxu0 0.0
        %1280 = vmatpush1.msra.mxu0 %v1273
        %1281 = vmatprep.subr.mxu0 0.0
        %1282 = vmatpush1.msra.mxu0 0.0
        %1283 = vmatprep.subr.mxu0 0.0
        %1284 = vmatpush1.msra.mxu0 0.0
        %1285 = vmatprep.subr.mxu0 0.0
        %1286 = vmatpush1.msra.mxu0 0.0
        %1287 = vmatprep.subr.mxu0 0.0
        %1288 = vmatpush1.msra.mxu0 0.0
        %1289 = vmatprep.subr.mxu0 0.0
        %1290 = vmatpush1.msra.mxu0 0.0
        %1291 = vmatprep.subr.mxu0 0.0
        %1292 = vmatpush1.msra.mxu0 0.0
        %1293 = vmatprep.subr.mxu0 0.0
        %1294 = vmatpush1.msra.mxu0 0.0
        %1295 = vmatprep.subr.mxu0 0.0
        %1296 = vmatpush1.msra.mxu0 0.0
        %1297 = vmatprep.subr.mxu0 0.0
        %1298 = vmatpush1.msra.mxu0 0.0
        %1299 = vmatprep.subr.mxu0 0.0
        %1300 = vmatpush1.msra.mxu0 0.0
        %1301 = vmatprep.subr.mxu0 0.0
        %1302 = vmatpush1.msra.mxu0 0.0
        %1303 = vmatprep.subr.mxu0 0.0
        %1304 = vmatpush1.msra.mxu0 0.0
        %1305 = vmatprep.subr.mxu0 0.0
        %1306 = vmatpush1.msra.mxu0 0.0
        %1307 = vmatprep.subr.mxu0 0.0
        %1308 = vmatpush1.msra.mxu0 0.0
        %1309 = vmatprep.subr.mxu0 0.0
        %1310 = vmatpush1.msra.mxu0 0.0
        %1311 = vmatprep.subr.mxu0 0.0
        %1312 = vmatpush1.msra.mxu0 0.0
        %1313 = vmatprep.subr.mxu0 0.0
        %1314 = vmatpush1.msra.mxu0 0.0
        %1315 = vmatprep.subr.mxu0 0.0
        %1316 = vmatpush1.msra.mxu0 0.0
        %1317 = vmatprep.subr.mxu0 0.0
        %1318 = vmatpush1.msra.mxu0 0.0
        %1319 = vmatprep.subr.mxu0 0.0
        %1320 = vmatpush1.msra.mxu0 0.0
        %1321 = vmatprep.subr.mxu0 0.0
        %1322 = vmatpush1.msra.mxu0 0.0
        %1323 = vmatprep.subr.mxu0 0.0
        %1324 = vmatpush1.msra.mxu0 0.0
        %1325 = vmatprep.subr.mxu0 0.0
        %1326 = vmatpush1.msra.mxu0 0.0
        %1327 = vmatprep.subr.mxu0 0.0
        %1328 = vmatpush1.msra.mxu0 0.0
        %1329 = vmatprep.subr.mxu0 0.0
        %1330 = vmatpush1.msra.mxu0 0.0
        %1331 = vmatprep.subr.mxu0 0.0
        %1332 = vmatpush1.msra.mxu0 0.0
        %1333 = vmatprep.subr.mxu0 0.0
        %1334 = vmatpush1.msra.mxu0 0.0
        %1335 = vmatprep.subr.mxu0 0.0
        %1336 = vmatpush1.msra.mxu0 0.0
        %1337 = vmatprep.subr.mxu0 0.0
        %1338 = vmatpush1.msra.mxu0 0.0
        %1339 = vmatprep.mubr.f32.mxu0 0.0
        %1340 = vmatmul.mubr.f32.gmra.mrb[0].mxu0 %v1268
        %v1341 = vpop.f32.mrb[0].mxu0
        %v1342 = vadd.f32 0.0, %v1341
        %v1343 = vpop.f32.mrb[0].mxu0
        %1344 = vmatprep.mubr.f32.mxu0 0.0
        %1345 = vmatmul.mubr.f32.gmra.mrb[0].mxu0 %v1270
        %v1346 = vpop.f32.mrb[0].mxu0
        %v1347 = vadd.f32 0.0, %v1346
        %v1348 = vpop.f32.mrb[0].mxu0
        %1349 = vdwg.mxu0
        %v1350 = vadd.f32 %v1257, %v1342
        %v1351 = vadd.f32 %v1258, %v1347
        %s1352 = scalar_lea.vmem %s5, 72
        %v1353 = vld [vmem:[%s1352] sm:$0xff]
        %v1354 = vld [vmem:[%s1352 + $0x8] sm:$0xff]
        %v1355 = vld [vmem:[%s1352 + $0x10] sm:$0x3f]
        %v1356 = vrot.slane %v715, 3
        %v1357 = vrot.slane %v716, 3
        %v1358 = vsel %vm677, %v1356, %v1357
        %v1359 = vrot.slane %v717, 3
        %v1360 = vsel %vm677, %v1357, %v1359
        %v1361 = vsel %vm809, %v1358, 0
        %v1363 = vsel %vm809, %v1360, 0
        %v1366 = vsel %vm679, %v1355, 0
        %1368 = vmatprep.subr.mxu0 0.0
        %1369 = vmatpush1.msra.mxu0 %v1353
        %1370 = vmatprep.subr.mxu0 0.0
        %1371 = vmatpush1.msra.mxu0 %v1354
        %1372 = vmatprep.subr.mxu0 0.0
        %1373 = vmatpush1.msra.mxu0 %v1366
        %1374 = vmatprep.subr.mxu0 0.0
        %1375 = vmatpush1.msra.mxu0 0.0
        %1376 = vmatprep.subr.mxu0 0.0
        %1377 = vmatpush1.msra.mxu0 0.0
        %1378 = vmatprep.subr.mxu0 0.0
        %1379 = vmatpush1.msra.mxu0 0.0
        %1380 = vmatprep.subr.mxu0 0.0
        %1381 = vmatpush1.msra.mxu0 0.0
        %1382 = vmatprep.subr.mxu0 0.0
        %1383 = vmatpush1.msra.mxu0 0.0
        %1384 = vmatprep.subr.mxu0 0.0
        %1385 = vmatpush1.msra.mxu0 0.0
        %1386 = vmatprep.subr.mxu0 0.0
        %1387 = vmatpush1.msra.mxu0 0.0
        %1388 = vmatprep.subr.mxu0 0.0
        %1389 = vmatpush1.msra.mxu0 0.0
        %1390 = vmatprep.subr.mxu0 0.0
        %1391 = vmatpush1.msra.mxu0 0.0
        %1392 = vmatprep.subr.mxu0 0.0
        %1393 = vmatpush1.msra.mxu0 0.0
        %1394 = vmatprep.subr.mxu0 0.0
        %1395 = vmatpush1.msra.mxu0 0.0
        %1396 = vmatprep.subr.mxu0 0.0
        %1397 = vmatpush1.msra.mxu0 0.0
        %1398 = vmatprep.subr.mxu0 0.0
        %1399 = vmatpush1.msra.mxu0 0.0
        %1400 = vmatprep.subr.mxu0 0.0
        %1401 = vmatpush1.msra.mxu0 0.0
        %1402 = vmatprep.subr.mxu0 0.0
        %1403 = vmatpush1.msra.mxu0 0.0
        %1404 = vmatprep.subr.mxu0 0.0
        %1405 = vmatpush1.msra.mxu0 0.0
        %1406 = vmatprep.subr.mxu0 0.0
        %1407 = vmatpush1.msra.mxu0 0.0
        %1408 = vmatprep.subr.mxu0 0.0
        %1409 = vmatpush1.msra.mxu0 0.0
        %1410 = vmatprep.subr.mxu0 0.0
        %1411 = vmatpush1.msra.mxu0 0.0
        %1412 = vmatprep.subr.mxu0 0.0
        %1413 = vmatpush1.msra.mxu0 0.0
        %1414 = vmatprep.subr.mxu0 0.0
        %1415 = vmatpush1.msra.mxu0 0.0
        %1416 = vmatprep.subr.mxu0 0.0
        %1417 = vmatpush1.msra.mxu0 0.0
        %1418 = vmatprep.subr.mxu0 0.0
        %1419 = vmatpush1.msra.mxu0 0.0
        %1420 = vmatprep.subr.mxu0 0.0
        %1421 = vmatpush1.msra.mxu0 0.0
        %1422 = vmatprep.subr.mxu0 0.0
        %1423 = vmatpush1.msra.mxu0 0.0
        %1424 = vmatprep.subr.mxu0 0.0
        %1425 = vmatpush1.msra.mxu0 0.0
        %1426 = vmatprep.subr.mxu0 0.0
        %1427 = vmatpush1.msra.mxu0 0.0
        %1428 = vmatprep.subr.mxu0 0.0
        %1429 = vmatpush1.msra.mxu0 0.0
        %1430 = vmatprep.subr.mxu0 0.0
        %1431 = vmatpush1.msra.mxu0 0.0
        %1432 = vmatprep.mubr.f32.mxu0 0.0
        %1433 = vmatmul.mubr.f32.gmra.mrb[0].mxu0 %v1361
        %v1434 = vpop.f32.mrb[0].mxu0
        %v1435 = vadd.f32 0.0, %v1434
        %v1436 = vpop.f32.mrb[0].mxu0
        %1437 = vmatprep.mubr.f32.mxu0 0.0
        %1438 = vmatmul.mubr.f32.gmra.mrb[0].mxu0 %v1363
        %v1439 = vpop.f32.mrb[0].mxu0
        %v1440 = vadd.f32 0.0, %v1439
        %v1441 = vpop.f32.mrb[0].mxu0
        %1442 = vdwg.mxu0
        %v1443 = vadd.f32 %v1350, %v1435
        %v1444 = vadd.f32 %v1351, %v1440
        %s1445 = scalar_lea.vmem %s5, 240
        %v1446 = vld [vmem:[%s1445] sm:$0xff]
        %v1447 = vld [vmem:[%s1445 + $0x8] sm:$0xff]
        %v1448 = vld [vmem:[%s1445 + $0x10] sm:$0x3f]
        %v1449 = vrot.slane %v799, 3
        %v1450 = vrot.slane %v800, 3
        %v1451 = vsel %vm677, %v1449, %v1450
        %v1452 = vrot.slane %v801, 3
        %v1453 = vsel %vm677, %v1450, %v1452
        %v1454 = vsel %vm809, %v1451, 0
        %v1456 = vsel %vm809, %v1453, 0
        %v1459 = vsel %vm679, %v1448, 0
        %1461 = vmatprep.subr.mxu0 0.0
        %1462 = vmatpush1.msra.mxu0 %v1446
        %1463 = vmatprep.subr.mxu0 0.0
        %1464 = vmatpush1.msra.mxu0 %v1447
        %1465 = vmatprep.subr.mxu0 0.0
        %1466 = vmatpush1.msra.mxu0 %v1459
        %1467 = vmatprep.subr.mxu0 0.0
        %1468 = vmatpush1.msra.mxu0 0.0
        %1469 = vmatprep.subr.mxu0 0.0
        %1470 = vmatpush1.msra.mxu0 0.0
        %1471 = vmatprep.subr.mxu0 0.0
        %1472 = vmatpush1.msra.mxu0 0.0
        %1473 = vmatprep.subr.mxu0 0.0
        %1474 = vmatpush1.msra.mxu0 0.0
        %1475 = vmatprep.subr.mxu0 0.0
        %1476 = vmatpush1.msra.mxu0 0.0
        %1477 = vmatprep.subr.mxu0 0.0
        %1478 = vmatpush1.msra.mxu0 0.0
        %1479 = vmatprep.subr.mxu0 0.0
        %1480 = vmatpush1.msra.mxu0 0.0
        %1481 = vmatprep.subr.mxu0 0.0
        %1482 = vmatpush1.msra.mxu0 0.0
        %1483 = vmatprep.subr.mxu0 0.0
        %1484 = vmatpush1.msra.mxu0 0.0
        %1485 = vmatprep.subr.mxu0 0.0
        %1486 = vmatpush1.msra.mxu0 0.0
        %1487 = vmatprep.subr.mxu0 0.0
        %1488 = vmatpush1.msra.mxu0 0.0
        %1489 = vmatprep.subr.mxu0 0.0
        %1490 = vmatpush1.msra.mxu0 0.0
        %1491 = vmatprep.subr.mxu0 0.0
        %1492 = vmatpush1.msra.mxu0 0.0
        %1493 = vmatprep.subr.mxu0 0.0
        %1494 = vmatpush1.msra.mxu0 0.0
        %1495 = vmatprep.subr.mxu0 0.0
        %1496 = vmatpush1.msra.mxu0 0.0
        %1497 = vmatprep.subr.mxu0 0.0
        %1498 = vmatpush1.msra.mxu0 0.0
        %1499 = vmatprep.subr.mxu0 0.0
        %1500 = vmatpush1.msra.mxu0 0.0
        %1501 = vmatprep.subr.mxu0 0.0
        %1502 = vmatpush1.msra.mxu0 0.0
        %1503 = vmatprep.subr.mxu0 0.0
        %1504 = vmatpush1.msra.mxu0 0.0
        %1505 = vmatprep.subr.mxu0 0.0
        %1506 = vmatpush1.msra.mxu0 0.0
        %1507 = vmatprep.subr.mxu0 0.0
        %1508 = vmatpush1.msra.mxu0 0.0
        %1509 = vmatprep.subr.mxu0 0.0
        %1510 = vmatpush1.msra.mxu0 0.0
        %1511 = vmatprep.subr.mxu0 0.0
        %1512 = vmatpush1.msra.mxu0 0.0
        %1513 = vmatprep.subr.mxu0 0.0
        %1514 = vmatpush1.msra.mxu0 0.0
        %1515 = vmatprep.subr.mxu0 0.0
        %1516 = vmatpush1.msra.mxu0 0.0
        %1517 = vmatprep.subr.mxu0 0.0
        %1518 = vmatpush1.msra.mxu0 0.0
        %1519 = vmatprep.subr.mxu0 0.0
        %1520 = vmatpush1.msra.mxu0 0.0
        %1521 = vmatprep.subr.mxu0 0.0
        %1522 = vmatpush1.msra.mxu0 0.0
        %1523 = vmatprep.subr.mxu0 0.0
        %1524 = vmatpush1.msra.mxu0 0.0
        %1525 = vmatprep.mubr.f32.mxu0 0.0
        %1526 = vmatmul.mubr.f32.gmra.mrb[0].mxu0 %v1454
        %v1527 = vpop.f32.mrb[0].mxu0
        %v1528 = vadd.f32 0.0, %v1527
        %v1529 = vpop.f32.mrb[0].mxu0
        %1530 = vmatprep.mubr.f32.mxu0 0.0
        %1531 = vmatmul.mubr.f32.gmra.mrb[0].mxu0 %v1456
        %v1532 = vpop.f32.mrb[0].mxu0
        %v1533 = vadd.f32 0.0, %v1532
        %v1534 = vpop.f32.mrb[0].mxu0
        %1535 = vdwg.mxu0
        %v1536 = vadd.f32 %v1443, %v1528
        %v1537 = vadd.f32 %v1444, %v1533
        %s1538 = scalar_lea.vmem %s5, 96
        %v1539 = vld [vmem:[%s1538] sm:$0xff]
        %v1540 = vld [vmem:[%s1538 + $0x8] sm:$0xff]
        %v1541 = vld [vmem:[%s1538 + $0x10] sm:$0x3f]
        %v1542 = vrot.slane %v715, 4
        %v1543 = vrot.slane %v716, 4
        %v1544 = vsel %vm675, %v1542, %v1543
        %v1545 = vrot.slane %v717, 4
        %v1546 = vsel %vm675, %v1543, %v1545
        %v1547 = vsel %vm809, %v1544, 0
        %v1549 = vsel %vm809, %v1546, 0
        %v1552 = vsel %vm679, %v1541, 0
        %1554 = vmatprep.subr.mxu0 0.0
        %1555 = vmatpush1.msra.mxu0 %v1539
        %1556 = vmatprep.subr.mxu0 0.0
        %1557 = vmatpush1.msra.mxu0 %v1540
        %1558 = vmatprep.subr.mxu0 0.0
        %1559 = vmatpush1.msra.mxu0 %v1552
        %1560 = vmatprep.subr.mxu0 0.0
        %1561 = vmatpush1.msra.mxu0 0.0
        %1562 = vmatprep.subr.mxu0 0.0
        %1563 = vmatpush1.msra.mxu0 0.0
        %1564 = vmatprep.subr.mxu0 0.0
        %1565 = vmatpush1.msra.mxu0 0.0
        %1566 = vmatprep.subr.mxu0 0.0
        %1567 = vmatpush1.msra.mxu0 0.0
        %1568 = vmatprep.subr.mxu0 0.0
        %1569 = vmatpush1.msra.mxu0 0.0
        %1570 = vmatprep.subr.mxu0 0.0
        %1571 = vmatpush1.msra.mxu0 0.0
        %1572 = vmatprep.subr.mxu0 0.0
        %1573 = vmatpush1.msra.mxu0 0.0
        %1574 = vmatprep.subr.mxu0 0.0
        %1575 = vmatpush1.msra.mxu0 0.0
        %1576 = vmatprep.subr.mxu0 0.0
        %1577 = vmatpush1.msra.mxu0 0.0
        %1578 = vmatprep.subr.mxu0 0.0
        %1579 = vmatpush1.msra.mxu0 0.0
        %1580 = vmatprep.subr.mxu0 0.0
        %1581 = vmatpush1.msra.mxu0 0.0
        %1582 = vmatprep.subr.mxu0 0.0
        %1583 = vmatpush1.msra.mxu0 0.0
        %1584 = vmatprep.subr.mxu0 0.0
        %1585 = vmatpush1.msra.mxu0 0.0
        %1586 = vmatprep.subr.mxu0 0.0
        %1587 = vmatpush1.msra.mxu0 0.0
        %1588 = vmatprep.subr.mxu0 0.0
        %1589 = vmatpush1.msra.mxu0 0.0
        %1590 = vmatprep.subr.mxu0 0.0
        %1591 = vmatpush1.msra.mxu0 0.0
        %1592 = vmatprep.subr.mxu0 0.0
        %1593 = vmatpush1.msra.mxu0 0.0
        %1594 = vmatprep.subr.mxu0 0.0
        %1595 = vmatpush1.msra.mxu0 0.0
        %1596 = vmatprep.subr.mxu0 0.0
        %1597 = vmatpush1.msra.mxu0 0.0
        %1598 = vmatprep.subr.mxu0 0.0
        %1599 = vmatpush1.msra.mxu0 0.0
        %1600 = vmatprep.subr.mxu0 0.0
        %1601 = vmatpush1.msra.mxu0 0.0
        %1602 = vmatprep.subr.mxu0 0.0
        %1603 = vmatpush1.msra.mxu0 0.0
        %1604 = vmatprep.subr.mxu0 0.0
        %1605 = vmatpush1.msra.mxu0 0.0
        %1606 = vmatprep.subr.mxu0 0.0
        %1607 = vmatpush1.msra.mxu0 0.0
        %1608 = vmatprep.subr.mxu0 0.0
        %1609 = vmatpush1.msra.mxu0 0.0
        %1610 = vmatprep.subr.mxu0 0.0
        %1611 = vmatpush1.msra.mxu0 0.0
        %1612 = vmatprep.subr.mxu0 0.0
        %1613 = vmatpush1.msra.mxu0 0.0
        %1614 = vmatprep.subr.mxu0 0.0
        %1615 = vmatpush1.msra.mxu0 0.0
        %1616 = vmatprep.subr.mxu0 0.0
        %1617 = vmatpush1.msra.mxu0 0.0
        %1618 = vmatprep.mubr.f32.mxu0 0.0
        %1619 = vmatmul.mubr.f32.gmra.mrb[0].mxu0 %v1547
        %v1620 = vpop.f32.mrb[0].mxu0
        %v1621 = vadd.f32 0.0, %v1620
        %v1622 = vpop.f32.mrb[0].mxu0
        %1623 = vmatprep.mubr.f32.mxu0 0.0
        %1624 = vmatmul.mubr.f32.gmra.mrb[0].mxu0 %v1549
        %v1625 = vpop.f32.mrb[0].mxu0
        %v1626 = vadd.f32 0.0, %v1625
        %v1627 = vpop.f32.mrb[0].mxu0
        %1628 = vdwg.mxu0
        %v1629 = vadd.f32 %v1536, %v1621
        %v1630 = vadd.f32 %v1537, %v1626
        %s1631 = scalar_lea.vmem %s5, 264
        %v1632 = vld [vmem:[%s1631] sm:$0xff]
        %v1633 = vld [vmem:[%s1631 + $0x8] sm:$0xff]
        %v1634 = vld [vmem:[%s1631 + $0x10] sm:$0x3f]
        %v1635 = vrot.slane %v799, 4
        %v1636 = vrot.slane %v800, 4
        %v1637 = vsel %vm675, %v1635, %v1636
        %v1638 = vrot.slane %v801, 4
        %v1639 = vsel %vm675, %v1636, %v1638
        %v1640 = vsel %vm809, %v1637, 0
        %v1642 = vsel %vm809, %v1639, 0
        %v1645 = vsel %vm679, %v1634, 0
        %1647 = vmatprep.subr.mxu0 0.0
        %1648 = vmatpush1.msra.mxu0 %v1632
        %1649 = vmatprep.subr.mxu0 0.0
        %1650 = vmatpush1.msra.mxu0 %v1633
        %1651 = vmatprep.subr.mxu0 0.0
        %1652 = vmatpush1.msra.mxu0 %v1645
        %1653 = vmatprep.subr.mxu0 0.0
        %1654 = vmatpush1.msra.mxu0 0.0
        %1655 = vmatprep.subr.mxu0 0.0
        %1656 = vmatpush1.msra.mxu0 0.0
        %1657 = vmatprep.subr.mxu0 0.0
        %1658 = vmatpush1.msra.mxu0 0.0
        %1659 = vmatprep.subr.mxu0 0.0
        %1660 = vmatpush1.msra.mxu0 0.0
        %1661 = vmatprep.subr.mxu0 0.0
        %1662 = vmatpush1.msra.mxu0 0.0
        %1663 = vmatprep.subr.mxu0 0.0
        %1664 = vmatpush1.msra.mxu0 0.0
        %1665 = vmatprep.subr.mxu0 0.0
        %1666 = vmatpush1.msra.mxu0 0.0
        %1667 = vmatprep.subr.mxu0 0.0
        %1668 = vmatpush1.msra.mxu0 0.0
        %1669 = vmatprep.subr.mxu0 0.0
        %1670 = vmatpush1.msra.mxu0 0.0
        %1671 = vmatprep.subr.mxu0 0.0
        %1672 = vmatpush1.msra.mxu0 0.0
        %1673 = vmatprep.subr.mxu0 0.0
        %1674 = vmatpush1.msra.mxu0 0.0
        %1675 = vmatprep.subr.mxu0 0.0
        %1676 = vmatpush1.msra.mxu0 0.0
        %1677 = vmatprep.subr.mxu0 0.0
        %1678 = vmatpush1.msra.mxu0 0.0
        %1679 = vmatprep.subr.mxu0 0.0
        %1680 = vmatpush1.msra.mxu0 0.0
        %1681 = vmatprep.subr.mxu0 0.0
        %1682 = vmatpush1.msra.mxu0 0.0
        %1683 = vmatprep.subr.mxu0 0.0
        %1684 = vmatpush1.msra.mxu0 0.0
        %1685 = vmatprep.subr.mxu0 0.0
        %1686 = vmatpush1.msra.mxu0 0.0
        %1687 = vmatprep.subr.mxu0 0.0
        %1688 = vmatpush1.msra.mxu0 0.0
        %1689 = vmatprep.subr.mxu0 0.0
        %1690 = vmatpush1.msra.mxu0 0.0
        %1691 = vmatprep.subr.mxu0 0.0
        %1692 = vmatpush1.msra.mxu0 0.0
        %1693 = vmatprep.subr.mxu0 0.0
        %1694 = vmatpush1.msra.mxu0 0.0
        %1695 = vmatprep.subr.mxu0 0.0
        %1696 = vmatpush1.msra.mxu0 0.0
        %1697 = vmatprep.subr.mxu0 0.0
        %1698 = vmatpush1.msra.mxu0 0.0
        %1699 = vmatprep.subr.mxu0 0.0
        %1700 = vmatpush1.msra.mxu0 0.0
        %1701 = vmatprep.subr.mxu0 0.0
        %1702 = vmatpush1.msra.mxu0 0.0
        %1703 = vmatprep.subr.mxu0 0.0
        %1704 = vmatpush1.msra.mxu0 0.0
        %1705 = vmatprep.subr.mxu0 0.0
        %1706 = vmatpush1.msra.mxu0 0.0
        %1707 = vmatprep.subr.mxu0 0.0
        %1708 = vmatpush1.msra.mxu0 0.0
        %1709 = vmatprep.subr.mxu0 0.0
        %1710 = vmatpush1.msra.mxu0 0.0
        %1711 = vmatprep.mubr.f32.mxu0 0.0
        %1712 = vmatmul.mubr.f32.gmra.mrb[0].mxu0 %v1640
        %v1713 = vpop.f32.mrb[0].mxu0
        %v1714 = vadd.f32 0.0, %v1713
        %v1715 = vpop.f32.mrb[0].mxu0
        %1716 = vmatprep.mubr.f32.mxu0 0.0
        %1717 = vmatmul.mubr.f32.gmra.mrb[0].mxu0 %v1642
        %v1718 = vpop.f32.mrb[0].mxu0
        %v1719 = vadd.f32 0.0, %v1718
        %v1720 = vpop.f32.mrb[0].mxu0
        %1721 = vdwg.mxu0
        %v1722 = vadd.f32 %v1629, %v1714
        %v1723 = vadd.f32 %v1630, %v1719
        %s1724 = scalar_lea.vmem %s5, 120
        %v1725 = vld [vmem:[%s1724] sm:$0xff]
        %v1726 = vld [vmem:[%s1724 + $0x8] sm:$0xff]
        %v1727 = vld [vmem:[%s1724 + $0x10] sm:$0x3f]
        %v1728 = vrot.slane %v715, 5
        %v1729 = vrot.slane %v716, 5
        %v1730 = vsel %vm673, %v1728, %v1729
        %v1731 = vrot.slane %v717, 5
        %v1732 = vsel %vm673, %v1729, %v1731
        %v1733 = vsel %vm809, %v1730, 0
        %v1735 = vsel %vm809, %v1732, 0
        %v1738 = vsel %vm679, %v1727, 0
        %1740 = vmatprep.subr.mxu0 0.0
        %1741 = vmatpush1.msra.mxu0 %v1725
        %1742 = vmatprep.subr.mxu0 0.0
        %1743 = vmatpush1.msra.mxu0 %v1726
        %1744 = vmatprep.subr.mxu0 0.0
        %1745 = vmatpush1.msra.mxu0 %v1738
        %1746 = vmatprep.subr.mxu0 0.0
        %1747 = vmatpush1.msra.mxu0 0.0
        %1748 = vmatprep.subr.mxu0 0.0
        %1749 = vmatpush1.msra.mxu0 0.0
        %1750 = vmatprep.subr.mxu0 0.0
        %1751 = vmatpush1.msra.mxu0 0.0
        %1752 = vmatprep.subr.mxu0 0.0
        %1753 = vmatpush1.msra.mxu0 0.0
        %1754 = vmatprep.subr.mxu0 0.0
        %1755 = vmatpush1.msra.mxu0 0.0
        %1756 = vmatprep.subr.mxu0 0.0
        %1757 = vmatpush1.msra.mxu0 0.0
        %1758 = vmatprep.subr.mxu0 0.0
        %1759 = vmatpush1.msra.mxu0 0.0
        %1760 = vmatprep.subr.mxu0 0.0
        %1761 = vmatpush1.msra.mxu0 0.0
        %1762 = vmatprep.subr.mxu0 0.0
        %1763 = vmatpush1.msra.mxu0 0.0
        %1764 = vmatprep.subr.mxu0 0.0
        %1765 = vmatpush1.msra.mxu0 0.0
        %1766 = vmatprep.subr.mxu0 0.0
        %1767 = vmatpush1.msra.mxu0 0.0
        %1768 = vmatprep.subr.mxu0 0.0
        %1769 = vmatpush1.msra.mxu0 0.0
        %1770 = vmatprep.subr.mxu0 0.0
        %1771 = vmatpush1.msra.mxu0 0.0
        %1772 = vmatprep.subr.mxu0 0.0
        %1773 = vmatpush1.msra.mxu0 0.0
        %1774 = vmatprep.subr.mxu0 0.0
        %1775 = vmatpush1.msra.mxu0 0.0
        %1776 = vmatprep.subr.mxu0 0.0
        %1777 = vmatpush1.msra.mxu0 0.0
        %1778 = vmatprep.subr.mxu0 0.0
        %1779 = vmatpush1.msra.mxu0 0.0
        %1780 = vmatprep.subr.mxu0 0.0
        %1781 = vmatpush1.msra.mxu0 0.0
        %1782 = vmatprep.subr.mxu0 0.0
        %1783 = vmatpush1.msra.mxu0 0.0
        %1784 = vmatprep.subr.mxu0 0.0
        %1785 = vmatpush1.msra.mxu0 0.0
        %1786 = vmatprep.subr.mxu0 0.0
        %1787 = vmatpush1.msra.mxu0 0.0
        %1788 = vmatprep.subr.mxu0 0.0
        %1789 = vmatpush1.msra.mxu0 0.0
        %1790 = vmatprep.subr.mxu0 0.0
        %1791 = vmatpush1.msra.mxu0 0.0
        %1792 = vmatprep.subr.mxu0 0.0
        %1793 = vmatpush1.msra.mxu0 0.0
        %1794 = vmatprep.subr.mxu0 0.0
        %1795 = vmatpush1.msra.mxu0 0.0
        %1796 = vmatprep.subr.mxu0 0.0
        %1797 = vmatpush1.msra.mxu0 0.0
        %1798 = vmatprep.subr.mxu0 0.0
        %1799 = vmatpush1.msra.mxu0 0.0
        %1800 = vmatprep.subr.mxu0 0.0
        %1801 = vmatpush1.msra.mxu0 0.0
        %1802 = vmatprep.subr.mxu0 0.0
        %1803 = vmatpush1.msra.mxu0 0.0
        %1804 = vmatprep.mubr.f32.mxu0 0.0
        %1805 = vmatmul.mubr.f32.gmra.mrb[0].mxu0 %v1733
        %v1806 = vpop.f32.mrb[0].mxu0
        %v1807 = vadd.f32 0.0, %v1806
        %v1808 = vpop.f32.mrb[0].mxu0
        %1809 = vmatprep.mubr.f32.mxu0 0.0
        %1810 = vmatmul.mubr.f32.gmra.mrb[0].mxu0 %v1735
        %v1811 = vpop.f32.mrb[0].mxu0
        %v1812 = vadd.f32 0.0, %v1811
        %v1813 = vpop.f32.mrb[0].mxu0
        %1814 = vdwg.mxu0
        %v1815 = vadd.f32 %v1722, %v1807
        %v1816 = vadd.f32 %v1723, %v1812
        %s1817 = scalar_lea.vmem %s5, 288
        %v1818 = vld [vmem:[%s1817] sm:$0xff]
        %v1819 = vld [vmem:[%s1817 + $0x8] sm:$0xff]
        %v1820 = vld [vmem:[%s1817 + $0x10] sm:$0x3f]
        %v1821 = vrot.slane %v799, 5
        %v1822 = vrot.slane %v800, 5
        %v1823 = vsel %vm673, %v1821, %v1822
        %v1824 = vrot.slane %v801, 5
        %v1825 = vsel %vm673, %v1822, %v1824
        %v1826 = vsel %vm809, %v1823, 0
        %v1828 = vsel %vm809, %v1825, 0
        %v1831 = vsel %vm679, %v1820, 0
        %1833 = vmatprep.subr.mxu0 0.0
        %1834 = vmatpush1.msra.mxu0 %v1818
        %1835 = vmatprep.subr.mxu0 0.0
        %1836 = vmatpush1.msra.mxu0 %v1819
        %1837 = vmatprep.subr.mxu0 0.0
        %1838 = vmatpush1.msra.mxu0 %v1831
        %1839 = vmatprep.subr.mxu0 0.0
        %1840 = vmatpush1.msra.mxu0 0.0
        %1841 = vmatprep.subr.mxu0 0.0
        %1842 = vmatpush1.msra.mxu0 0.0
        %1843 = vmatprep.subr.mxu0 0.0
        %1844 = vmatpush1.msra.mxu0 0.0
        %1845 = vmatprep.subr.mxu0 0.0
        %1846 = vmatpush1.msra.mxu0 0.0
        %1847 = vmatprep.subr.mxu0 0.0
        %1848 = vmatpush1.msra.mxu0 0.0
        %1849 = vmatprep.subr.mxu0 0.0
        %1850 = vmatpush1.msra.mxu0 0.0
        %1851 = vmatprep.subr.mxu0 0.0
        %1852 = vmatpush1.msra.mxu0 0.0
        %1853 = vmatprep.subr.mxu0 0.0
        %1854 = vmatpush1.msra.mxu0 0.0
        %1855 = vmatprep.subr.mxu0 0.0
        %1856 = vmatpush1.msra.mxu0 0.0
        %1857 = vmatprep.subr.mxu0 0.0
        %1858 = vmatpush1.msra.mxu0 0.0
        %1859 = vmatprep.subr.mxu0 0.0
        %1860 = vmatpush1.msra.mxu0 0.0
        %1861 = vmatprep.subr.mxu0 0.0
        %1862 = vmatpush1.msra.mxu0 0.0
        %1863 = vmatprep.subr.mxu0 0.0
        %1864 = vmatpush1.msra.mxu0 0.0
        %1865 = vmatprep.subr.mxu0 0.0
        %1866 = vmatpush1.msra.mxu0 0.0
        %1867 = vmatprep.subr.mxu0 0.0
        %1868 = vmatpush1.msra.mxu0 0.0
        %1869 = vmatprep.subr.mxu0 0.0
        %1870 = vmatpush1.msra.mxu0 0.0
        %1871 = vmatprep.subr.mxu0 0.0
        %1872 = vmatpush1.msra.mxu0 0.0
        %1873 = vmatprep.subr.mxu0 0.0
        %1874 = vmatpush1.msra.mxu0 0.0
        %1875 = vmatprep.subr.mxu0 0.0
        %1876 = vmatpush1.msra.mxu0 0.0
        %1877 = vmatprep.subr.mxu0 0.0
        %1878 = vmatpush1.msra.mxu0 0.0
        %1879 = vmatprep.subr.mxu0 0.0
        %1880 = vmatpush1.msra.mxu0 0.0
        %1881 = vmatprep.subr.mxu0 0.0
        %1882 = vmatpush1.msra.mxu0 0.0
        %1883 = vmatprep.subr.mxu0 0.0
        %1884 = vmatpush1.msra.mxu0 0.0
        %1885 = vmatprep.subr.mxu0 0.0
        %1886 = vmatpush1.msra.mxu0 0.0
        %1887 = vmatprep.subr.mxu0 0.0
        %1888 = vmatpush1.msra.mxu0 0.0
        %1889 = vmatprep.subr.mxu0 0.0
        %1890 = vmatpush1.msra.mxu0 0.0
        %1891 = vmatprep.subr.mxu0 0.0
        %1892 = vmatpush1.msra.mxu0 0.0
        %1893 = vmatprep.subr.mxu0 0.0
        %1894 = vmatpush1.msra.mxu0 0.0
        %1895 = vmatprep.subr.mxu0 0.0
        %1896 = vmatpush1.msra.mxu0 0.0
        %1897 = vmatprep.mubr.f32.mxu0 0.0
        %1898 = vmatmul.mubr.f32.gmra.mrb[0].mxu0 %v1826
        %v1899 = vpop.f32.mrb[0].mxu0
        %v1900 = vadd.f32 0.0, %v1899
        %v1901 = vpop.f32.mrb[0].mxu0
        %1902 = vmatprep.mubr.f32.mxu0 0.0
        %1903 = vmatmul.mubr.f32.gmra.mrb[0].mxu0 %v1828
        %v1904 = vpop.f32.mrb[0].mxu0
        %v1905 = vadd.f32 0.0, %v1904
        %v1906 = vpop.f32.mrb[0].mxu0
        %1907 = vdwg.mxu0
        %v1908 = vadd.f32 %v1815, %v1900
        %v1909 = vadd.f32 %v1816, %v1905
        %s1910 = scalar_lea.vmem %s5, 144
        %v1911 = vld [vmem:[%s1910] sm:$0xff]
        %v1912 = vld [vmem:[%s1910 + $0x8] sm:$0xff]
        %v1913 = vld [vmem:[%s1910 + $0x10] sm:$0x3f]
        %v1914 = vrot.slane %v715, 6
        %v1915 = vrot.slane %v716, 6
        %v1916 = vsel %vm477, %v1914, %v1915
        %v1917 = vrot.slane %v717, 6
        %v1918 = vsel %vm477, %v1915, %v1917
        %v1919 = vsel %vm809, %v1916, 0
        %v1921 = vsel %vm809, %v1918, 0
        %v1924 = vsel %vm679, %v1913, 0
        %1926 = vmatprep.subr.mxu0 0.0
        %1927 = vmatpush1.msra.mxu0 %v1911
        %1928 = vmatprep.subr.mxu0 0.0
        %1929 = vmatpush1.msra.mxu0 %v1912
        %1930 = vmatprep.subr.mxu0 0.0
        %1931 = vmatpush1.msra.mxu0 %v1924
        %1932 = vmatprep.subr.mxu0 0.0
        %1933 = vmatpush1.msra.mxu0 0.0
        %1934 = vmatprep.subr.mxu0 0.0
        %1935 = vmatpush1.msra.mxu0 0.0
        %1936 = vmatprep.subr.mxu0 0.0
        %1937 = vmatpush1.msra.mxu0 0.0
        %1938 = vmatprep.subr.mxu0 0.0
        %1939 = vmatpush1.msra.mxu0 0.0
        %1940 = vmatprep.subr.mxu0 0.0
        %1941 = vmatpush1.msra.mxu0 0.0
        %1942 = vmatprep.subr.mxu0 0.0
        %1943 = vmatpush1.msra.mxu0 0.0
        %1944 = vmatprep.subr.mxu0 0.0
        %1945 = vmatpush1.msra.mxu0 0.0
        %1946 = vmatprep.subr.mxu0 0.0
        %1947 = vmatpush1.msra.mxu0 0.0
        %1948 = vmatprep.subr.mxu0 0.0
        %1949 = vmatpush1.msra.mxu0 0.0
        %1950 = vmatprep.subr.mxu0 0.0
        %1951 = vmatpush1.msra.mxu0 0.0
        %1952 = vmatprep.subr.mxu0 0.0
        %1953 = vmatpush1.msra.mxu0 0.0
        %1954 = vmatprep.subr.mxu0 0.0
        %1955 = vmatpush1.msra.mxu0 0.0
        %1956 = vmatprep.subr.mxu0 0.0
        %1957 = vmatpush1.msra.mxu0 0.0
        %1958 = vmatprep.subr.mxu0 0.0
        %1959 = vmatpush1.msra.mxu0 0.0
        %1960 = vmatprep.subr.mxu0 0.0
        %1961 = vmatpush1.msra.mxu0 0.0
        %1962 = vmatprep.subr.mxu0 0.0
        %1963 = vmatpush1.msra.mxu0 0.0
        %1964 = vmatprep.subr.mxu0 0.0
        %1965 = vmatpush1.msra.mxu0 0.0
        %1966 = vmatprep.subr.mxu0 0.0
        %1967 = vmatpush1.msra.mxu0 0.0
        %1968 = vmatprep.subr.mxu0 0.0
        %1969 = vmatpush1.msra.mxu0 0.0
        %1970 = vmatprep.subr.mxu0 0.0
        %1971 = vmatpush1.msra.mxu0 0.0
        %1972 = vmatprep.subr.mxu0 0.0
        %1973 = vmatpush1.msra.mxu0 0.0
        %1974 = vmatprep.subr.mxu0 0.0
        %1975 = vmatpush1.msra.mxu0 0.0
        %1976 = vmatprep.subr.mxu0 0.0
        %1977 = vmatpush1.msra.mxu0 0.0
        %1978 = vmatprep.subr.mxu0 0.0
        %1979 = vmatpush1.msra.mxu0 0.0
        %1980 = vmatprep.subr.mxu0 0.0
        %1981 = vmatpush1.msra.mxu0 0.0
        %1982 = vmatprep.subr.mxu0 0.0
        %1983 = vmatpush1.msra.mxu0 0.0
        %1984 = vmatprep.subr.mxu0 0.0
        %1985 = vmatpush1.msra.mxu0 0.0
        %1986 = vmatprep.subr.mxu0 0.0
        %1987 = vmatpush1.msra.mxu0 0.0
        %1988 = vmatprep.subr.mxu0 0.0
        %1989 = vmatpush1.msra.mxu0 0.0
        %1990 = vmatprep.mubr.f32.mxu0 0.0
        %1991 = vmatmul.mubr.f32.gmra.mrb[0].mxu0 %v1919
        %v1992 = vpop.f32.mrb[0].mxu0
        %v1993 = vadd.f32 0.0, %v1992
        %v1994 = vpop.f32.mrb[0].mxu0
        %1995 = vmatprep.mubr.f32.mxu0 0.0
        %1996 = vmatmul.mubr.f32.gmra.mrb[0].mxu0 %v1921
        %v1997 = vpop.f32.mrb[0].mxu0
        %v1998 = vadd.f32 0.0, %v1997
        %v1999 = vpop.f32.mrb[0].mxu0
        %2000 = vdwg.mxu0
        %v2001 = vadd.f32 %v1908, %v1993
        %v2002 = vadd.f32 %v1909, %v1998
        %s2003 = scalar_lea.vmem %s5, 312
        %v2004 = vld [vmem:[%s2003] sm:$0xff]
        %v2005 = vld [vmem:[%s2003 + $0x8] sm:$0xff]
        %v2006 = vld [vmem:[%s2003 + $0x10] sm:$0x3f]
        %v2007 = vrot.slane %v799, 6
        %v2008 = vrot.slane %v800, 6
        %v2009 = vsel %vm477, %v2007, %v2008
        %v2010 = vrot.slane %v801, 6
        %v2011 = vsel %vm477, %v2008, %v2010
        %v2012 = vsel %vm809, %v2009, 0
        %v2014 = vsel %vm809, %v2011, 0
        %v2017 = vsel %vm679, %v2006, 0
        %2019 = vmatprep.subr.mxu0 0.0
        %2020 = vmatpush1.msra.mxu0 %v2004
        %2021 = vmatprep.subr.mxu0 0.0
        %2022 = vmatpush1.msra.mxu0 %v2005
        %2023 = vmatprep.subr.mxu0 0.0
        %2024 = vmatpush1.msra.mxu0 %v2017
        %2025 = vmatprep.subr.mxu0 0.0
        %2026 = vmatpush1.msra.mxu0 0.0
        %2027 = vmatprep.subr.mxu0 0.0
        %2028 = vmatpush1.msra.mxu0 0.0
        %2029 = vmatprep.subr.mxu0 0.0
        %2030 = vmatpush1.msra.mxu0 0.0
        %2031 = vmatprep.subr.mxu0 0.0
        %2032 = vmatpush1.msra.mxu0 0.0
        %2033 = vmatprep.subr.mxu0 0.0
        %2034 = vmatpush1.msra.mxu0 0.0
        %2035 = vmatprep.subr.mxu0 0.0
        %2036 = vmatpush1.msra.mxu0 0.0
        %2037 = vmatprep.subr.mxu0 0.0
        %2038 = vmatpush1.msra.mxu0 0.0
        %2039 = vmatprep.subr.mxu0 0.0
        %2040 = vmatpush1.msra.mxu0 0.0
        %2041 = vmatprep.subr.mxu0 0.0
        %2042 = vmatpush1.msra.mxu0 0.0
        %2043 = vmatprep.subr.mxu0 0.0
        %2044 = vmatpush1.msra.mxu0 0.0
        %2045 = vmatprep.subr.mxu0 0.0
        %2046 = vmatpush1.msra.mxu0 0.0
        %2047 = vmatprep.subr.mxu0 0.0
        %2048 = vmatpush1.msra.mxu0 0.0
        %2049 = vmatprep.subr.mxu0 0.0
        %2050 = vmatpush1.msra.mxu0 0.0
        %2051 = vmatprep.subr.mxu0 0.0
        %2052 = vmatpush1.msra.mxu0 0.0
        %2053 = vmatprep.subr.mxu0 0.0
        %2054 = vmatpush1.msra.mxu0 0.0
        %2055 = vmatprep.subr.mxu0 0.0
        %2056 = vmatpush1.msra.mxu0 0.0
        %2057 = vmatprep.subr.mxu0 0.0
        %2058 = vmatpush1.msra.mxu0 0.0
        %2059 = vmatprep.subr.mxu0 0.0
        %2060 = vmatpush1.msra.mxu0 0.0
        %2061 = vmatprep.subr.mxu0 0.0
        %2062 = vmatpush1.msra.mxu0 0.0
        %2063 = vmatprep.subr.mxu0 0.0
        %2064 = vmatpush1.msra.mxu0 0.0
        %2065 = vmatprep.subr.mxu0 0.0
        %2066 = vmatpush1.msra.mxu0 0.0
        %2067 = vmatprep.subr.mxu0 0.0
        %2068 = vmatpush1.msra.mxu0 0.0
        %2069 = vmatprep.subr.mxu0 0.0
        %2070 = vmatpush1.msra.mxu0 0.0
        %2071 = vmatprep.subr.mxu0 0.0
        %2072 = vmatpush1.msra.mxu0 0.0
        %2073 = vmatprep.subr.mxu0 0.0
        %2074 = vmatpush1.msra.mxu0 0.0
        %2075 = vmatprep.subr.mxu0 0.0
        %2076 = vmatpush1.msra.mxu0 0.0
        %2077 = vmatprep.subr.mxu0 0.0
        %2078 = vmatpush1.msra.mxu0 0.0
        %2079 = vmatprep.subr.mxu0 0.0
        %2080 = vmatpush1.msra.mxu0 0.0
        %2081 = vmatprep.subr.mxu0 0.0
        %2082 = vmatpush1.msra.mxu0 0.0
        %2083 = vmatprep.mubr.f32.mxu0 0.0
        %2084 = vmatmul.mubr.f32.gmra.mrb[0].mxu0 %v2012
        %v2085 = vpop.f32.mrb[0].mxu0
        %v2086 = vadd.f32 0.0, %v2085
        %v2087 = vpop.f32.mrb[0].mxu0
        %2088 = vmatprep.mubr.f32.mxu0 0.0
        %2089 = vmatmul.mubr.f32.gmra.mrb[0].mxu0 %v2014
        %v2090 = vpop.f32.mrb[0].mxu0
        %v2091 = vadd.f32 0.0, %v2090
        %v2092 = vpop.f32.mrb[0].mxu0
        %2093 = vdwg.mxu0
        %v2094 = vadd.f32 %v2001, %v2086
        %v2095 = vadd.f32 %v2002, %v2091
        %s2096 = sld [smem:[#allocation2]]
        %v2097 = vstv %s2096
        %v2098 = vadd.f32 %v2094, %v2097
        %v2099 = vadd.f32 %v2095, %v2097
        %vm2100 = vcmask 130048
        %v2101 = vsel %vm2100, %v2098, 0.0
        %v2102 = vsel %vm2100, %v2099, 0.0
        %v2103 = vadd.f32 %v2101, %v2102
        %2104 = vadd.xlane.f32.xlu0 %v2103
        %v2105 = vpop.xlane.xlu0 %2104
        %v2106 = vrot.slane %v2105, 4
        %v2107 = vadd.f32 %v2105, %v2106
        %v2108 = vrot.slane %v2107, 2
        %v2109 = vadd.f32 %v2107, %v2108
        %v2110 = vrot.slane %v2109, 1
        %v2111 = vadd.f32 %v2109, %v2110
        %s2112 = vtos %v2111
        %v2113 = vrcp.pop 256.0
        %s2114 = vtos %v2113
        %s2115 = smul.f32 %s2112, %s2114
        %v2116 = vstv %s2115
        %v2117 = vsub.f32 %v2098, %v2116
        %v2118 = vsub.f32 %v2099, %v2116
        %v2119 = vmul.f32 %v2117, %v2117
        %v2120 = vmul.f32 %v2118, %v2118
        %v2121 = vsel %vm2100, %v2119, 0.0
        %v2122 = vsel %vm2100, %v2120, 0.0
        %v2123 = vadd.f32 %v2121, %v2122
        %2124 = vadd.xlane.f32.xlu0 %v2123
        %v2125 = vpop.xlane.xlu0 %2124
        %v2126 = vrot.slane %v2125, 4
        %v2127 = vadd.f32 %v2125, %v2126
        %v2128 = vrot.slane %v2127, 2
        %v2129 = vadd.f32 %v2127, %v2128
        %v2130 = vrot.slane %v2129, 1
        %v2131 = vadd.f32 %v2129, %v2130
        %s2132 = vtos %v2131
        %v2133 = vrcp.pop 256.0
        %s2134 = vtos %v2133
        %s2135 = smul.f32 %s2132, %s2134
        %s2136 = sadd.f32 %s2135, 1e-05
        %v2137 = vstv %s2136
        %v2138 = vrsqrt.pop %v2137
        %s2139 = vtos %v2138
        %v2140 = vstv %s2139
        %v2141 = vmul.f32 %v2117, %v2140
        %v2142 = vmul.f32 %v2118, %v2140
        %v2143 = vxor.u32 %v2141, 2147483648
        %v2144 = vxor.u32 %v2142, 2147483648
        %v2145 = vmul.f32 %v2143, 1.442695
        %v2146 = vpow.pop %v2145
        %v2147 = vmul.f32 %v2144, 1.442695
        %v2148 = vpow.pop %v2147
        %v2149 = vadd.f32 %v2146, 1.0
        %v2150 = vadd.f32 %v2148, 1.0
        %v2151 = vrcp.pop %v2149
        %v2152 = vmul.f32 1.0, %v2151
        %v2153 = vrcp.pop %v2150
        %v2154 = vmul.f32 1.0, %v2153
        %v2156 = vrot.slane %v2152, 1
        %2157 = vrot.lane.b32.xlu0 %v2156, 16
        %v2158 = vpop.permute.xlu0 %2157
        %v2160 = vrot.slane %v2152, 2
        %2161 = vrot.lane.b32.xlu0 %v2160, 32
        %v2162 = vpop.permute.xlu0 %2161
        %v2164 = vrot.slane %v2152, 3
        %2165 = vrot.lane.b32.xlu0 %v2164, 48
        %v2166 = vpop.permute.xlu0 %2165
        %v2168 = vrot.slane %v2152, 4
        %2169 = vrot.lane.b32.xlu0 %v2168, 64
        %v2170 = vpop.permute.xlu0 %2169
        %v2172 = vrot.slane %v2152, 5
        %2173 = vrot.lane.b32.xlu0 %v2172, 80
        %v2174 = vpop.permute.xlu0 %2173
        %v2176 = vrot.slane %v2152, 6
        %2177 = vrot.lane.b32.xlu0 %v2176, 96
        %v2178 = vpop.permute.xlu0 %2177
        %v2180 = vrot.slane %v2152, 7
        %2181 = vrot.lane.b32.xlu0 %v2180, 112
        %v2182 = vpop.permute.xlu0 %2181
        %v2185 = vrot.slane %v2154, 1
        %2186 = vrot.lane.b32.xlu0 %v2185, 16
        %v2187 = vpop.permute.xlu0 %2186
        %v2189 = vrot.slane %v2154, 2
        %2190 = vrot.lane.b32.xlu0 %v2189, 32
        %v2191 = vpop.permute.xlu0 %2190
        %v2193 = vrot.slane %v2154, 3
        %2194 = vrot.lane.b32.xlu0 %v2193, 48
        %v2195 = vpop.permute.xlu0 %2194
        %v2197 = vrot.slane %v2154, 4
        %2198 = vrot.lane.b32.xlu0 %v2197, 64
        %v2199 = vpop.permute.xlu0 %2198
        %v2201 = vrot.slane %v2154, 5
        %2202 = vrot.lane.b32.xlu0 %v2201, 80
        %v2203 = vpop.permute.xlu0 %2202
        %v2205 = vrot.slane %v2154, 6
        %2206 = vrot.lane.b32.xlu0 %v2205, 96
        %v2207 = vpop.permute.xlu0 %2206
        %v2209 = vrot.slane %v2154, 7
        %2210 = vrot.lane.b32.xlu0 %v2209, 112
        %v2211 = vpop.permute.xlu0 %2210
        %v2213 = vsel %vm2100, %v2152, %v2158
        %v2214 = vsel %vm384, %v2213, %v2162
        %vm2215 = vcmask 392192
        %v2216 = vsel %vm2215, %v2214, %v2166
        %vm2217 = vcmask 523264
        %v2218 = vsel %vm2217, %v2216, %v2170
        %vm2219 = vcmask 654336
        %v2220 = vsel %vm2219, %v2218, %v2174
        %vm2221 = vcmask 785408
        %v2222 = vsel %vm2221, %v2220, %v2178
        %vm2223 = vcmask 916480
        %v2224 = vsel %vm2223, %v2222, %v2182
        %v2225 = vsel %vm2100, %v2154, %v2187
        %v2226 = vsel %vm384, %v2225, %v2191
        %v2227 = vsel %vm2215, %v2226, %v2195
        %v2228 = vsel %vm2217, %v2227, %v2199
        %v2229 = vsel %vm2219, %v2228, %v2203
        %v2230 = vsel %vm2221, %v2229, %v2207
        %v2231 = vsel %vm2223, %v2230, %v2211
        %v2232 = vlaneseq
        %v2233 = vshrl.u32 %v2232, 7
        %v2234 = vsub.s32 0, %v2233
        %v2235 = vrot.slane %v2224, %v2234
        %v2236 = vlaneseq
        %v2237 = vshrl.u32 %v2236, 7
        %v2238 = vsub.s32 0, %v2237
        %v2239 = vrot.slane %v2231, %v2238
        %v2240 = vmul.f32 %v580, %v2235
        %v2241 = vmul.f32 %v581, %v2239
        %v2242 = vmul.f32 %v582, %v2235
        %v2243 = vmul.f32 %v583, %v2239
        %v2244 = vmul.f32 %v584, %v2235
        %v2245 = vmul.f32 %v585, %v2239
        %v2246 = vmul.f32 %v586, %v2235
        %v2247 = vmul.f32 %v587, %v2239
        %2248 = vst [vmem:[%s272] sm:$0xff] %v2240
        %2249 = vst [vmem:[%s272 + $0x8] sm:$0xff] %v2241
        %2250 = vst [vmem:[%s272 + $0x10] sm:$0xff] %v2242
        %2251 = vst [vmem:[%s272 + $0x18] sm:$0xff] %v2243
        %2252 = vst [vmem:[%s272 + $0x20] sm:$0xff] %v2244
        %2253 = vst [vmem:[%s272 + $0x28] sm:$0xff] %v2245
        %2254 = vst [vmem:[%s272 + $0x30] sm:$0xff] %v2246
        %2255 = vst [vmem:[%s272 + $0x38] sm:$0xff] %v2247
        %s2256 = sand.u32 %s182, 1
        %s2257 = scalar_lea.sflag [#allocation4], %s2256
        %s2258 = sand.u32 %s182, 1
        %s2259 = smul.addr %s2258, 64
        %s2260 = scalar_lea.vmem [#allocation3], %s2259
        // Predicated region
        $region49: #{tpu_custom_call.1} parent=47 // pred_check
          %p2261 = pneg %p192
        $region50: #{tpu_custom_call.1} parent=47 // pred_check_branch
          %2263 = sbr.rel (%p2261) target = $region52
        $region51: #{tpu_custom_call.1} parent=47 // pred_region
          %s2265 = ssub.s32 1024, 1024
          %2266 = vsyncadd %s2257, %s2265
          %s2267 = smul.addr %s22, 8
          %s2268 = smul.addr %s2267, 128
          %s2269 = scalar_lea.hbm %s7, %s2268
          %s2270 = sshll.u32 %s2260, 4
          %s2271 = int_to_ptr.vmem [resolvable:$true] %s2270
          %2276 = dma.vmem_to_hbm [thread:$0]  %s2271, 1024, %s2269, %s2257, 256, 256, 16
        $region52: #{tpu_custom_call.1} parent=47 // pred_fallthru
          _
      $region48: #{tpu_custom_call.1} parent=5 // pred_fallthru
        _
      %p2277 = scmp.le.s32.totalorder 2, %s17
      // Predicated region
      $region53: #{tpu_custom_call.1} parent=5 // pred_check
        %p2278 = pneg %p2277
      $region54: #{tpu_custom_call.1} parent=5 // pred_check_branch
        %2280 = sbr.rel (%p2278) target = $region56
      $region55: #{tpu_custom_call.1} parent=5 // pred_region
        %s2281 = ssub.s32 %s17, 2
        // Predicated region
        $region57: #{tpu_custom_call.1} parent=55 // pred_check
          %p2282 = pneg %p198
        $region58: #{tpu_custom_call.1} parent=55 // pred_check_branch
          %2284 = sbr.rel (%p2282) target = $region60
        $region59: #{tpu_custom_call.1} parent=55 // pred_region
          %s2285 = sand.u32 %s183, 1
          %s2286 = scalar_lea.sflag [#allocation4], %s2285
          %s2287 = sand.u32 %s183, 1
          %s2288 = smul.addr %s2287, 64
          %s2289 = scalar_lea.vmem [#allocation3], %s2288
          %2290 = dma.done %s2286, 1024
        $region60: #{tpu_custom_call.1} parent=55 // pred_fallthru
          _
      $region56: #{tpu_custom_call.1} parent=5 // pred_fallthru
        _
    $region6: #{tpu_custom_call.1} parent=1 // loop_footer
      %s21 = sadd.s32 1, %s17
    $region7: #{tpu_custom_call.1} parent=1 // loop_footer_branch
      %16 = sbr.rel target = $region3
    $region8: #{tpu_custom_call.1} parent=1 // loop_exit
      _
    %2291 = vsyncpa [#allocation4], 1
    %s2292 = scalar_lea.sflag [#allocation4], 1
    %2293 = vsyncpa %s2292, 1

</llo_original>
